<compile_context>
chip_gen: v7x
topology: tpu7x:2x2x1
jax: 0.10.0
libtpu: 0.0.40
codegen_flags: <defaults>
</compile_context>

<pallas_src>
import math
import numpy as np
import jax
import jax.numpy as jnp
from jax import lax
from jax.experimental import pallas as pl
from jax.experimental.pallas import tpu as pltpu

# ----------------------------- configuration --------------------------------
B, F, E, S = 4, 4, 8, 8              # batch, features, embed_size, retrieval seq len
FEAT_NUM = 50                        # synthetic feature-vocabulary size
D = F * E                            # 32  = flattened query/key dim
N = 2 * F + 1                        # 9   = rows of c_combine
N_INTER = N * (N - 1) // 2           # 36  = strict upper-triangular entries
D_IN = (2 * F + 1) * (E + F)         # 108 = first MLP layer input dim
HIDDEN = [32, 16]                    # hidden_layers
H0 = HIDDEN[0]
OUT_DIM = HIDDEN[-1]
BN_EPS = 1e-5

HEAD_ROWS = 2 * D + E                # 72  = N*E rows of W0 that multiply [q|feat|lab]
U_ROWS = (N - 1) * N * E             # 576 = expanded interaction rows
B_PAD = 8                            # pad query rows to a sublane-aligned block
ROWS = B_PAD + B * S                 # 40  = rows fed to the fused embedding matmul
TAB_ROWS = F * FEAT_NUM + 2          # 202 = block-diag feature table + 2 label rows
TAB_COLS = D + E                     # 40  = [feature embedding | label embedding]
assert D_IN == HEAD_ROWS + N_INTER

# --- packed weight "blob" row offsets (all multiples of 8 => aligned slices) ---
OFF_WATT = 0                         # W_att            (D, H0)      rows 0:32
OFF_W0H = OFF_WATT + D               # W0[:HEAD_ROWS]   (72, H0)     rows 32:104
OFF_U = OFF_W0H + HEAD_ROWS          # U                (576, H0)    rows 104:680
OFF_B0 = OFF_U + U_ROWS              # b0               (1, H0)      row  680
OFF_G0 = OFF_B0 + 8                  # gamma            (1, H0)      row  688
OFF_BE0 = OFF_G0 + 8                 # beta             (1, H0)      row  696
OFF_BOUT = OFF_BE0 + 8               # b_out (padded)   (1, H0)      row  704
OFF_WOUT = OFF_BOUT + 8              # W_out (padded)   (40, H0)     rows 712:752
BLOB_ROWS = OFF_WOUT + H0 + E        # 752

# ---- host-side constants (built once with numpy) ----------------------------
_IU, _JU = np.triu_indices(N, k=1)                       # row-major strict upper-tri

# REP: (2*N*E, 576) 0/1 replication constant.
#   rows 0:72   (REP_I): T1[:, i*72+j*E+e] = c_i[e]
#   rows 72:144 (REP_J): T2[:, i*72+j*E+e] = c_j[e]
_REP = np.zeros((2 * N * E, U_ROWS), np.float32)
for _i in range(N - 1):
    for _j in range(N):
        for _e in range(E):
            _col = _i * (N * E) + _j * E + _e
            _REP[_i * E + _e, _col] = 1.0
            _REP[N * E + _j * E + _e, _col] = 1.0

# exact row-gather map for U: U[i*72+j*E+e, :] = W0_inter[k(i,j), :] (zero elsewhere)
_TAKE = np.zeros(U_ROWS, np.int32)
_UMASK = np.zeros((U_ROWS, 1), np.float32)
for _k in range(N_INTER):
    _i, _j = int(_IU[_k]), int(_JU[_k])
    _rs = _i * (N * E) + _j * E
    _TAKE[_rs:_rs + E] = _k
    _UMASK[_rs:_rs + E] = 1.0


# ------------------------------ fused Pallas kernel --------------------------
def _rim_kernel(idx_ref, table_ref, rep_ref, blob_ref, o_ref, c_s, hc_s):
    f32 = jnp.float32

    # ---- 1) ALL embedding lookups in ONE gather-free matmul -----------------
    # idx columns 0..F-1: per-feature shifted feature ids, column F: shifted label
    # id (dummy for query rows), column F+1: valid_lens (query rows only).
    iota_t = lax.broadcasted_iota(jnp.int32, (ROWS, TAB_ROWS), 1)
    oh = jnp.zeros((ROWS, TAB_ROWS), f32)
    for c in range(F + 1):                                   # disjoint id ranges -> multi-hot
        oh = oh + jnp.where(idx_ref[:, c:c + 1] == iota_t, 1.0, 0.0)
    emb = jnp.dot(oh, table_ref[...], preferred_element_type=f32)   # (ROWS, D+E)
    q = emb[0:B, 0:D]                                        # (B, D)      query embeddings
    kv = emb[B_PAD:ROWS, :]                                  # (B*S, D+E)  [keys/values | label emb]
    rk = kv[:, 0:D]                                          # (B*S, D)    keys == values
    c_s[:, 0:D] = q

    # ---- 2) batched dot-product attention with masked softmax ---------------
    watt = blob_ref[OFF_WATT:OFF_WATT + D, :]
    qw = jnp.dot(q, watt, preferred_element_type=f32)                      # (B, D)
    scores = lax.dot_general(qw, rk, (((1,), (1,)), ((), ())),
                             preferred_element_type=f32) * (1.0 / math.sqrt(D))
    col = lax.broadcasted_iota(jnp.int32, (B, B * S), 1)
    row = lax.broadcasted_iota(jnp.int32, (B, B * S), 0)
    b_start = row * S
    vlen = idx_ref[0:B, F + 1:F + 2]                          # (B, 1) valid_lens
    in_block = (col >= b_start) & (col < b_start + S)         # own retrieval block
    valid = (col >= b_start) & (col < b_start + vlen)         # sequence_mask
    scores = jnp.where(valid, scores,
                       jnp.where(in_block, -1000000.0, -1e30))
    m = jnp.max(scores, axis=-1, keepdims=True)
    ex = jnp.exp(scores - m)
    # exact divide kept (not approx reciprocal): BN over B=4 amplifies small
    # relative errors and this is a single-vreg op.
    p = ex / jnp.sum(ex, axis=-1, keepdims=True)              # off-block weights == 0
    agg = jnp.dot(p, kv, preferred_element_type=f32)          # (B, D+E) = [aggre_feat | aggre_lab]
    c_s[:, D:D + D + E] = agg                                 # one wide store
    lab_agg = agg[:, D:D + E]                                 # (B, E)

    # ---- 3) first MLP layer: fused head matmul + single-shot interaction fold
    cflat = c_s[...]                                          # (B, N*E) = c_combine (flat)
    w0h = blob_ref[OFF_W0H:OFF_W0H + HEAD_ROWS, :]
    b0 = blob_ref[OFF_B0:OFF_B0 + 1, :]
    h = jnp.dot(cflat, w0h, preferred_element_type=f32) + b0  # (B, H0)
    t1 = jnp.dot(cflat, rep_ref[0:N * E, :], preferred_element_type=f32)          # c_i[e]
    t2 = jnp.dot(cflat, rep_ref[N * E:2 * N * E, :], preferred_element_type=f32)  # c_j[e]
    u = blob_ref[OFF_U:OFF_U + U_ROWS, :]
    h = h + jnp.dot(t1 * t2, u, preferred_element_type=f32)   # sum_{i<j}(c_i.c_j) W0_k

    # ---- 4) BatchNorm1d (training-mode batch stats) -> ReLU -> final Linear --
    g0 = blob_ref[OFF_G0:OFF_G0 + 1, :]
    be0 = blob_ref[OFF_BE0:OFF_BE0 + 1, :]
    mu = jnp.mean(h, axis=0, keepdims=True)
    var = jnp.mean((h - mu) ** 2, axis=0, keepdims=True)      # biased variance
    h = (h - mu) * lax.rsqrt(var + BN_EPS) * g0 + be0
    hc_s[:, 0:H0] = jnp.maximum(h, 0.0)                       # ReLU
    hc_s[:, H0:H0 + E] = lab_agg                              # concat([h, aggre_lab])
    wout = blob_ref[OFF_WOUT:OFF_WOUT + H0 + E, 0:OUT_DIM]
    bout = blob_ref[OFF_BOUT:OFF_BOUT + 1, 0:OUT_DIM]
    o_ref[...] = jnp.dot(hc_s[...], wout, preferred_element_type=f32) + bout


# ------------------------------- wrapper --------------------------------------
def rim_forward(params, x, ret, ret_label, valid_lens):
    (emb_feat, emb_lab, W_att, W0, b0, g0, be0, Wout, bout) = params

    # ---- weight-side packing (tiny XLA ops on parameters only) ----
    # block-diagonal embedding table: feature f -> rows f*V:(f+1)*V, cols f*E:(f+1)*E;
    # label rows at the bottom, cols D:D+E.
    table = jnp.zeros((TAB_ROWS, TAB_COLS), jnp.float32)
    for f in range(F):
        table = table.at[f * FEAT_NUM:(f + 1) * FEAT_NUM,
                         f * E:(f + 1) * E].set(emb_feat)
    table = table.at[F * FEAT_NUM:, D:].set(emb_lab)

    # exact row gather (no selection matmul -> no precision loss on W0)
    U = W0[HEAD_ROWS:][jnp.asarray(_TAKE)] * jnp.asarray(_UMASK)      # (576, H0)

    blob = jnp.zeros((BLOB_ROWS, H0), jnp.float32)
    blob = blob.at[OFF_WATT:OFF_WATT + D, :].set(W_att)
    blob = blob.at[OFF_W0H:OFF_W0H + HEAD_ROWS, :].set(W0[:HEAD_ROWS])
    blob = blob.at[OFF_U:OFF_U + U_ROWS, :].set(U)
    blob = blob.at[OFF_B0, :].set(b0)
    blob = blob.at[OFF_G0, :].set(g0)
    blob = blob.at[OFF_BE0, :].set(be0)
    blob = blob.at[OFF_BOUT, :OUT_DIM].set(bout)
    blob = blob.at[OFF_WOUT:OFF_WOUT + H0 + E, :OUT_DIM].set(Wout)

    # ---- index packing: one int32 array carries every lookup + valid_lens ----
    offs = (jnp.arange(F, dtype=jnp.int32) * FEAT_NUM)[None, :]
    q_rows = jnp.concatenate(
        [x.astype(jnp.int32) + offs,
         jnp.full((B, 1), F * FEAT_NUM, jnp.int32),            # dummy label id
         valid_lens.reshape(B, 1).astype(jnp.int32)], axis=1)
    pad_rows = jnp.zeros((B_PAD - B, F + 2), jnp.int32)         # discarded rows
    r_rows = jnp.concatenate(
        [ret.reshape(B * S, F).astype(jnp.int32) + offs,
         ret_label.reshape(B * S, 1).astype(jnp.int32) + F * FEAT_NUM,
         jnp.zeros((B * S, 1), jnp.int32)], axis=1)
    idx = jnp.concatenate([q_rows, pad_rows, r_rows], axis=0)   # (ROWS, F+2)

    vmem = pl.BlockSpec(memory_space=pltpu.MemorySpace.VMEM)
    return pl.pallas_call(
        _rim_kernel,
        out_shape=jax.ShapeDtypeStruct((B, OUT_DIM), jnp.float32),
        in_specs=[vmem] * 4,
        out_specs=vmem,
        scratch_shapes=[pltpu.VMEM((B, N * E), jnp.float32),    # c_combine (flat)
                        pltpu.VMEM((B, H0 + E), jnp.float32)],  # [relu(h) | aggre_lab]
    )(idx, table, jnp.asarray(_REP), blob)


# --------------------------- pure-JAX reference -------------------------------
def rim_reference(params, x, ret, ret_label, valid_lens):
    (emb_feat, emb_lab, W_att, W0, b0, g0, be0, Wout, bout) = params
    x_emb = emb_feat[x]
    ret_emb = emb_feat[ret].reshape(B, S, D)
    lab_emb = emb_lab[ret_label]
    q = x_emb.reshape(B, 1, D)
    qw = jnp.einsum('bqd,de->bqe', q, W_att)
    scores = jnp.einsum('bqd,bsd->bqs', qw, ret_emb) / math.sqrt(D)
    mask = jnp.arange(S)[None, None, :] < valid_lens[:, None, None]
    scores = jnp.where(mask, scores, -1000000.0)
    w = jax.nn.softmax(scores, axis=-1)
    feat = jnp.einsum('bqs,bsd->bqd', w, ret_emb)
    lab = jnp.einsum('bqs,bse->bqe', w, lab_emb)
    c = jnp.concatenate([x_emb, feat.reshape(B, F, E), lab], axis=1)
    inter = jnp.einsum('bne,bme->bnm', c, c)
    iu, ju = np.triu_indices(N, k=1)
    inter_flat = inter[:, iu, ju]
    inp = jnp.concatenate([q[:, 0], feat[:, 0], lab[:, 0], inter_flat], axis=1)
    h = inp @ W0 + b0
    mu = h.mean(0, keepdims=True)
    var = ((h - mu) ** 2).mean(0, keepdims=True)
    h = (h - mu) * lax.rsqrt(var + BN_EPS) * g0 + be0
    h = jnp.maximum(h, 0.0)
    hc = jnp.concatenate([h, lab[:, 0]], axis=1)
    return hc @ Wout + bout


# ---------------------------------- main --------------------------------------
if __name__ == "__main__":
    key = jax.random.PRNGKey(0)
    ks = jax.random.split(key, 12)

    # deterministic synthetic parameters (shapes follow RIM.__init__)
    emb_feat = jax.random.normal(ks[0], (FEAT_NUM, E), jnp.float32) * 0.1
    emb_lab = jax.random.normal(ks[1], (2, E), jnp.float32) * 0.1
    W_att = jax.random.normal(ks[2], (D, D), jnp.float32) * (1.0 / math.sqrt(D))
    W0 = jax.random.normal(ks[3], (D_IN, H0), jnp.float32) * (1.0 / math.sqrt(D_IN))
    b0 = jax.random.normal(ks[4], (H0,), jnp.float32) * 0.01
    g0 = jnp.ones((H0,), jnp.float32)         # BatchNorm1d gamma
    be0 = jnp.zeros((H0,), jnp.float32)       # BatchNorm1d beta
    W_out = jax.random.normal(ks[5], (H0 + E, OUT_DIM), jnp.float32) * (1.0 / math.sqrt(H0 + E))
    b_out = jax.random.normal(ks[6], (OUT_DIM,), jnp.float32) * 0.01
    params = (emb_feat, emb_lab, W_att, W0, b0, g0, be0, W_out, b_out)

    # deterministic inputs
    x = jax.random.randint(ks[7], (B, F), 0, FEAT_NUM, dtype=jnp.int32)
    ret = jax.random.randint(ks[8], (B, S, F), 0, FEAT_NUM, dtype=jnp.int32)
    ret_label = jax.random.randint(ks[9], (B, S), 0, 2, dtype=jnp.int32)
    valid_lens = jnp.array([3, 8, 5, 1], dtype=jnp.int32)

    out = jax.jit(rim_forward)(params, x, ret, ret_label, valid_lens)
    out = jax.block_until_ready(out)

    ref = jax.block_until_ready(rim_reference(params, x, ret, ret_label, valid_lens))
    assert out.shape == (B, OUT_DIM)
    np.testing.assert_allclose(np.asarray(out), np.asarray(ref), rtol=1e-3, atol=1e-3)

    print("KERNEL_OK")
</pallas_src>

<mosaic_0001>
module attributes {stable_mosaic.version = 11 : i64} {
  func.func @_rim_kernel(%arg0: memref<40x6xi32, #tpu.memory_space<vmem>>, %arg1: memref<202x40xf32, #tpu.memory_space<vmem>>, %arg2: memref<144x576xf32, #tpu.memory_space<vmem>>, %arg3: memref<752x32xf32, #tpu.memory_space<vmem>>, %arg4: memref<4x16xf32, #tpu.memory_space<vmem>>, %arg5: memref<4x72xf32, #tpu.memory_space<vmem>>, %arg6: memref<4x40xf32, #tpu.memory_space<vmem>>) attributes {dimension_semantics = [], scalar_prefetch = 0 : i64, scratch_operands = 2 : i64, tpu.core_type = #tpu.core_type<tc>} {
    %0 = tpu.iota {dimensions = array<i32: 1>} : vector<40x202xi32>
    %cst = arith.constant 0.000000e+00 : f32
    %1 = vector.broadcast %cst : f32 to vector<40x202xf32>
    %c0 = arith.constant 0 : index
    %c0_0 = arith.constant 0 : index
    %2 = vector.load %arg0[%c0, %c0_0] : memref<40x6xi32, #tpu.memory_space<vmem>>, vector<40x1xi32>
    %3 = vector.broadcast %2 : vector<40x1xi32> to vector<40x202xi32>
    %4 = arith.cmpi eq, %3, %0 : vector<40x202xi32>
    %cst_1 = arith.constant 1.000000e+00 : f32
    %cst_2 = arith.constant 0.000000e+00 : f32
    %5 = vector.broadcast %cst_1 : f32 to vector<40x202xf32>
    %6 = vector.broadcast %cst_2 : f32 to vector<40x202xf32>
    %7 = arith.select %4, %5, %6 : vector<40x202xi1>, vector<40x202xf32>
    %8 = arith.addf %1, %7 : vector<40x202xf32>
    %c0_3 = arith.constant 0 : index
    %c1 = arith.constant 1 : index
    %9 = vector.load %arg0[%c0_3, %c1] : memref<40x6xi32, #tpu.memory_space<vmem>>, vector<40x1xi32>
    %10 = vector.broadcast %9 : vector<40x1xi32> to vector<40x202xi32>
    %11 = arith.cmpi eq, %10, %0 : vector<40x202xi32>
    %cst_4 = arith.constant 1.000000e+00 : f32
    %cst_5 = arith.constant 0.000000e+00 : f32
    %12 = vector.broadcast %cst_4 : f32 to vector<40x202xf32>
    %13 = vector.broadcast %cst_5 : f32 to vector<40x202xf32>
    %14 = arith.select %11, %12, %13 : vector<40x202xi1>, vector<40x202xf32>
    %15 = arith.addf %8, %14 : vector<40x202xf32>
    %c0_6 = arith.constant 0 : index
    %c2 = arith.constant 2 : index
    %16 = vector.load %arg0[%c0_6, %c2] : memref<40x6xi32, #tpu.memory_space<vmem>>, vector<40x1xi32>
    %17 = vector.broadcast %16 : vector<40x1xi32> to vector<40x202xi32>
    %18 = arith.cmpi eq, %17, %0 : vector<40x202xi32>
    %cst_7 = arith.constant 1.000000e+00 : f32
    %cst_8 = arith.constant 0.000000e+00 : f32
    %19 = vector.broadcast %cst_7 : f32 to vector<40x202xf32>
    %20 = vector.broadcast %cst_8 : f32 to vector<40x202xf32>
    %21 = arith.select %18, %19, %20 : vector<40x202xi1>, vector<40x202xf32>
    %22 = arith.addf %15, %21 : vector<40x202xf32>
    %c0_9 = arith.constant 0 : index
    %c3 = arith.constant 3 : index
    %23 = vector.load %arg0[%c0_9, %c3] : memref<40x6xi32, #tpu.memory_space<vmem>>, vector<40x1xi32>
    %24 = vector.broadcast %23 : vector<40x1xi32> to vector<40x202xi32>
    %25 = arith.cmpi eq, %24, %0 : vector<40x202xi32>
    %cst_10 = arith.constant 1.000000e+00 : f32
    %cst_11 = arith.constant 0.000000e+00 : f32
    %26 = vector.broadcast %cst_10 : f32 to vector<40x202xf32>
    %27 = vector.broadcast %cst_11 : f32 to vector<40x202xf32>
    %28 = arith.select %25, %26, %27 : vector<40x202xi1>, vector<40x202xf32>
    %29 = arith.addf %22, %28 : vector<40x202xf32>
    %c0_12 = arith.constant 0 : index
    %c4 = arith.constant 4 : index
    %30 = vector.load %arg0[%c0_12, %c4] : memref<40x6xi32, #tpu.memory_space<vmem>>, vector<40x1xi32>
    %31 = vector.broadcast %30 : vector<40x1xi32> to vector<40x202xi32>
    %32 = arith.cmpi eq, %31, %0 : vector<40x202xi32>
    %cst_13 = arith.constant 1.000000e+00 : f32
    %cst_14 = arith.constant 0.000000e+00 : f32
    %33 = vector.broadcast %cst_13 : f32 to vector<40x202xf32>
    %34 = vector.broadcast %cst_14 : f32 to vector<40x202xf32>
    %35 = arith.select %32, %33, %34 : vector<40x202xi1>, vector<40x202xf32>
    %36 = arith.addf %29, %35 : vector<40x202xf32>
    %c0_15 = arith.constant 0 : index
    %c0_16 = arith.constant 0 : index
    %37 = vector.load %arg1[%c0_15, %c0_16] : memref<202x40xf32, #tpu.memory_space<vmem>>, vector<202x40xf32>
    %cst_17 = arith.constant dense<0.000000e+00> : vector<40x40xf32>
    %38 = tpu.matmul %36, %37, %cst_17 {dimension_numbers = #tpu.dot_dimension_numbers<[1], [0], [0], [1], [0, 0, 1, 1], [], []>} : vector<40x202xf32>, vector<202x40xf32>, vector<40x40xf32> -> vector<40x40xf32>
    %39 = vector.extract_strided_slice %38 {offsets = [0, 0], sizes = [4, 32], strides = [1, 1]} : vector<40x40xf32> to vector<4x32xf32>
    %40 = vector.extract_strided_slice %38 {offsets = [8, 0], sizes = [32, 40], strides = [1, 1]} : vector<40x40xf32> to vector<32x40xf32>
    %41 = vector.extract_strided_slice %40 {offsets = [0, 0], sizes = [32, 32], strides = [1, 1]} : vector<32x40xf32> to vector<32x32xf32>
    %c0_18 = arith.constant 0 : index
    %c0_19 = arith.constant 0 : index
    %42 = vector.load %arg5[%c0_18, %c0_19] : memref<4x72xf32, #tpu.memory_space<vmem>>, vector<4x32xf32>
    tpu.vector_store %arg5[%c0_18, %c0_19], %39 {strides = array<i32>} : memref<4x72xf32, #tpu.memory_space<vmem>>, vector<4x32xf32>,
    %c0_20 = arith.constant 0 : index
    %c0_21 = arith.constant 0 : index
    %43 = vector.load %arg3[%c0_20, %c0_21] : memref<752x32xf32, #tpu.memory_space<vmem>>, vector<32x32xf32>
    %cst_22 = arith.constant dense<0.000000e+00> : vector<4x32xf32>
    %44 = tpu.matmul %39, %43, %cst_22 {dimension_numbers = #tpu.dot_dimension_numbers<[1], [0], [0], [1], [0, 0, 1, 1], [], []>} : vector<4x32xf32>, vector<32x32xf32>, vector<4x32xf32> -> vector<4x32xf32>
    %cst_23 = arith.constant dense<0.000000e+00> : vector<4x32xf32>
    %45 = tpu.matmul %44, %41, %cst_23 {dimension_numbers = #tpu.dot_dimension_numbers<[1], [1], [0], [0], [0, 0, 1, 0], [], []>} : vector<4x32xf32>, vector<32x32xf32>, vector<4x32xf32> -> vector<4x32xf32>
    %cst_24 = arith.constant 0.176776692 : f32
    %46 = vector.broadcast %cst_24 : f32 to vector<4x32xf32>
    %47 = arith.mulf %45, %46 : vector<4x32xf32>
    %48 = tpu.iota {dimensions = array<i32: 1>} : vector<4x32xi32>
    %49 = tpu.iota {dimensions = array<i32: 0>} : vector<4x32xi32>
    %c8_i32 = arith.constant 8 : i32
    %50 = vector.broadcast %c8_i32 : i32 to vector<4x32xi32>
    %51 = arith.muli %49, %50 : vector<4x32xi32>
    %c0_25 = arith.constant 0 : index
    %c5 = arith.constant 5 : index
    %52 = vector.load %arg0[%c0_25, %c5] : memref<40x6xi32, #tpu.memory_space<vmem>>, vector<4x1xi32>
    %53 = arith.cmpi sge, %48, %51 : vector<4x32xi32>
    %c8_i32_26 = arith.constant 8 : i32
    %54 = vector.broadcast %c8_i32_26 : i32 to vector<4x32xi32>
    %55 = arith.addi %51, %54 : vector<4x32xi32>
    %56 = arith.cmpi slt, %48, %55 : vector<4x32xi32>
    %57 = arith.andi %53, %56 : vector<4x32xi1>
    %58 = arith.cmpi sge, %48, %51 : vector<4x32xi32>
    %59 = vector.broadcast %52 : vector<4x1xi32> to vector<4x32xi32>
    %60 = arith.addi %51, %59 : vector<4x32xi32>
    %61 = arith.cmpi slt, %48, %60 : vector<4x32xi32>
    %62 = arith.andi %58, %61 : vector<4x32xi1>
    %cst_27 = arith.constant -1.000000e+06 : f32
    %cst_28 = arith.constant -1.000000e+30 : f32
    %63 = vector.broadcast %cst_27 : f32 to vector<4x32xf32>
    %64 = vector.broadcast %cst_28 : f32 to vector<4x32xf32>
    %65 = arith.select %57, %63, %64 : vector<4x32xi1>, vector<4x32xf32>
    %66 = arith.select %62, %47, %65 : vector<4x32xi1>, vector<4x32xf32>
    %cst_29 = arith.constant dense<0xFF800000> : vector<4xf32>
    %67 = vector.multi_reduction <maximumf>, %66, %cst_29 [1] : vector<4x32xf32> to vector<4xf32>
    %68 = vector.shape_cast %67 : vector<4xf32> to vector<4x1xf32>
    %69 = vector.broadcast %68 : vector<4x1xf32> to vector<4x32xf32>
    %70 = arith.subf %66, %69 : vector<4x32xf32>
    %71 = math.exp %70 : vector<4x32xf32>
    %cst_30 = arith.constant dense<0.000000e+00> : vector<4xf32>
    %72 = vector.multi_reduction <add>, %71, %cst_30 [1] : vector<4x32xf32> to vector<4xf32>
    %73 = vector.shape_cast %72 : vector<4xf32> to vector<4x1xf32>
    %74 = vector.broadcast %73 : vector<4x1xf32> to vector<4x32xf32>
    %75 = arith.divf %71, %74 : vector<4x32xf32>
    %cst_31 = arith.constant dense<0.000000e+00> : vector<4x40xf32>
    %76 = tpu.matmul %75, %40, %cst_31 {dimension_numbers = #tpu.dot_dimension_numbers<[1], [0], [0], [1], [0, 0, 1, 1], [], []>} : vector<4x32xf32>, vector<32x40xf32>, vector<4x40xf32> -> vector<4x40xf32>
    %c0_32 = arith.constant 0 : index
    %c32 = arith.constant 32 : index
    %77 = vector.load %arg5[%c0_32, %c32] : memref<4x72xf32, #tpu.memory_space<vmem>>, vector<4x40xf32>
    tpu.vector_store %arg5[%c0_32, %c32], %76 {strides = array<i32>} : memref<4x72xf32, #tpu.memory_space<vmem>>, vector<4x40xf32>,
    %78 = vector.extract_strided_slice %76 {offsets = [0, 32], sizes = [4, 8], strides = [1, 1]} : vector<4x40xf32> to vector<4x8xf32>
    %c0_33 = arith.constant 0 : index
    %c0_34 = arith.constant 0 : index
    %79 = vector.load %arg5[%c0_33, %c0_34] : memref<4x72xf32, #tpu.memory_space<vmem>>, vector<4x72xf32>
    %c32_35 = arith.constant 32 : index
    %c0_36 = arith.constant 0 : index
    %80 = vector.load %arg3[%c32_35, %c0_36] : memref<752x32xf32, #tpu.memory_space<vmem>>, vector<72x32xf32>
    %c680 = arith.constant 680 : index
    %c0_37 = arith.constant 0 : index
    %81 = vector.load %arg3[%c680, %c0_37] : memref<752x32xf32, #tpu.memory_space<vmem>>, vector<1x32xf32>
    %cst_38 = arith.constant dense<0.000000e+00> : vector<4x32xf32>
    %82 = tpu.matmul %79, %80, %cst_38 {dimension_numbers = #tpu.dot_dimension_numbers<[1], [0], [0], [1], [0, 0, 1, 1], [], []>} : vector<4x72xf32>, vector<72x32xf32>, vector<4x32xf32> -> vector<4x32xf32>
    %83 = vector.broadcast %81 : vector<1x32xf32> to vector<4x32xf32>
    %84 = arith.addf %82, %83 : vector<4x32xf32>
    %c0_39 = arith.constant 0 : index
    %c0_40 = arith.constant 0 : index
    %85 = vector.load %arg2[%c0_39, %c0_40] : memref<144x576xf32, #tpu.memory_space<vmem>>, vector<72x576xf32>
    %cst_41 = arith.constant dense<0.000000e+00> : vector<4x576xf32>
    %86 = tpu.matmul %79, %85, %cst_41 {dimension_numbers = #tpu.dot_dimension_numbers<[1], [0], [0], [1], [0, 0, 1, 1], [], []>} : vector<4x72xf32>, vector<72x576xf32>, vector<4x576xf32> -> vector<4x576xf32>
    %c72 = arith.constant 72 : index
    %c0_42 = arith.constant 0 : index
    %87 = vector.load %arg2[%c72, %c0_42] : memref<144x576xf32, #tpu.memory_space<vmem>>, vector<72x576xf32>
    %cst_43 = arith.constant dense<0.000000e+00> : vector<4x576xf32>
    %88 = tpu.matmul %79, %87, %cst_43 {dimension_numbers = #tpu.dot_dimension_numbers<[1], [0], [0], [1], [0, 0, 1, 1], [], []>} : vector<4x72xf32>, vector<72x576xf32>, vector<4x576xf32> -> vector<4x576xf32>
    %c104 = arith.constant 104 : index
    %c0_44 = arith.constant 0 : index
    %89 = vector.load %arg3[%c104, %c0_44] : memref<752x32xf32, #tpu.memory_space<vmem>>, vector<576x32xf32>
    %90 = arith.mulf %86, %88 : vector<4x576xf32>
    %cst_45 = arith.constant dense<0.000000e+00> : vector<4x32xf32>
    %91 = tpu.matmul %90, %89, %cst_45 {dimension_numbers = #tpu.dot_dimension_numbers<[1], [0], [0], [1], [0, 0, 1, 1], [], []>} : vector<4x576xf32>, vector<576x32xf32>, vector<4x32xf32> -> vector<4x32xf32>
    %92 = arith.addf %84, %91 : vector<4x32xf32>
    %c688 = arith.constant 688 : index
    %c0_46 = arith.constant 0 : index
    %93 = vector.load %arg3[%c688, %c0_46] : memref<752x32xf32, #tpu.memory_space<vmem>>, vector<1x32xf32>
    %c696 = arith.constant 696 : index
    %c0_47 = arith.constant 0 : index
    %94 = vector.load %arg3[%c696, %c0_47] : memref<752x32xf32, #tpu.memory_space<vmem>>, vector<1x32xf32>
    %cst_48 = arith.constant dense<0.000000e+00> : vector<32xf32>
    %95 = vector.multi_reduction <add>, %92, %cst_48 [0] : vector<4x32xf32> to vector<32xf32>
    %96 = vector.shape_cast %95 : vector<32xf32> to vector<1x32xf32>
    %cst_49 = arith.constant 4.000000e+00 : f32
    %97 = vector.broadcast %cst_49 : f32 to vector<1x32xf32>
    %98 = arith.divf %96, %97 : vector<1x32xf32>
    %99 = vector.broadcast %98 : vector<1x32xf32> to vector<4x32xf32>
    %100 = arith.subf %92, %99 : vector<4x32xf32>
    %101 = arith.mulf %100, %100 : vector<4x32xf32>
    %cst_50 = arith.constant dense<0.000000e+00> : vector<32xf32>
    %102 = vector.multi_reduction <add>, %101, %cst_50 [0] : vector<4x32xf32> to vector<32xf32>
    %103 = vector.shape_cast %102 : vector<32xf32> to vector<1x32xf32>
    %cst_51 = arith.constant 4.000000e+00 : f32
    %104 = vector.broadcast %cst_51 : f32 to vector<1x32xf32>
    %105 = arith.divf %103, %104 : vector<1x32xf32>
    %106 = vector.broadcast %98 : vector<1x32xf32> to vector<4x32xf32>
    %107 = arith.subf %92, %106 : vector<4x32xf32>
    %cst_52 = arith.constant 9.99999974E-6 : f32
    %108 = vector.broadcast %cst_52 : f32 to vector<1x32xf32>
    %109 = arith.addf %105, %108 : vector<1x32xf32>
    %110 = math.rsqrt %109 : vector<1x32xf32>
    %111 = vector.broadcast %110 : vector<1x32xf32> to vector<4x32xf32>
    %112 = arith.mulf %107, %111 : vector<4x32xf32>
    %113 = vector.broadcast %93 : vector<1x32xf32> to vector<4x32xf32>
    %114 = arith.mulf %112, %113 : vector<4x32xf32>
    %115 = vector.broadcast %94 : vector<1x32xf32> to vector<4x32xf32>
    %116 = arith.addf %114, %115 : vector<4x32xf32>
    %cst_53 = arith.constant 0.000000e+00 : f32
    %117 = vector.broadcast %cst_53 : f32 to vector<4x32xf32>
    %118 = arith.maximumf %116, %117 : vector<4x32xf32>
    %c0_54 = arith.constant 0 : index
    %c0_55 = arith.constant 0 : index
    %119 = vector.load %arg6[%c0_54, %c0_55] : memref<4x40xf32, #tpu.memory_space<vmem>>, vector<4x32xf32>
    tpu.vector_store %arg6[%c0_54, %c0_55], %118 {strides = array<i32>} : memref<4x40xf32, #tpu.memory_space<vmem>>, vector<4x32xf32>,
    %c0_56 = arith.constant 0 : index
    %c32_57 = arith.constant 32 : index
    %120 = vector.load %arg6[%c0_56, %c32_57] : memref<4x40xf32, #tpu.memory_space<vmem>>, vector<4x8xf32>
    tpu.vector_store %arg6[%c0_56, %c32_57], %78 {strides = array<i32>} : memref<4x40xf32, #tpu.memory_space<vmem>>, vector<4x8xf32>,
    %c712 = arith.constant 712 : index
    %c0_58 = arith.constant 0 : index
    %121 = vector.load %arg3[%c712, %c0_58] : memref<752x32xf32, #tpu.memory_space<vmem>>, vector<40x16xf32>
    %c704 = arith.constant 704 : index
    %c0_59 = arith.constant 0 : index
    %122 = vector.load %arg3[%c704, %c0_59] : memref<752x32xf32, #tpu.memory_space<vmem>>, vector<1x16xf32>
    %c0_60 = arith.constant 0 : index
    %c0_61 = arith.constant 0 : index
    %123 = vector.load %arg6[%c0_60, %c0_61] : memref<4x40xf32, #tpu.memory_space<vmem>>, vector<4x40xf32>
    %cst_62 = arith.constant dense<0.000000e+00> : vector<4x16xf32>
    %124 = tpu.matmul %123, %121, %cst_62 {dimension_numbers = #tpu.dot_dimension_numbers<[1], [0], [0], [1], [0, 0, 1, 1], [], []>} : vector<4x40xf32>, vector<40x16xf32>, vector<4x16xf32> -> vector<4x16xf32>
    %125 = vector.broadcast %122 : vector<1x16xf32> to vector<4x16xf32>
    %126 = arith.addf %124, %125 : vector<4x16xf32>
    %c0_63 = arith.constant 0 : index
    %c0_64 = arith.constant 0 : index
    %127 = vector.load %arg4[%c0_63, %c0_64] : memref<4x16xf32, #tpu.memory_space<vmem>>, vector<4x16xf32>
    tpu.vector_store %arg4[%c0_63, %c0_64], %126 {strides = array<i32>} : memref<4x16xf32, #tpu.memory_space<vmem>>, vector<4x16xf32>,
    return
  }
}

</mosaic_0001>

<llo_original>
// kernel: rim_forward.1
$region0: #{rim_forward.1}
  #allocation0 [shape = 'u32[]', space=smem, size = 0x4, offset = 0x4, fixed_abs, tag = 'smem constant byte address 0x4 - core index']
  #allocation1 [shape = 'u32[144,128]{1,0:T(1,128)}', space=vmem, size = 0x12000, scoped, tag = 'internal scratch']
  #allocation2 [shape = 'f32[4,72]{1,0:T(4,128)}', space=vmem, size = 0x800, scoped, tag = 'scratch operand']
  #allocation3 [shape = 'f32[4,40]{1,0:T(4,128)}', space=vmem, size = 0x800, scoped, tag = 'scratch operand']
  %s0 = inlined_call_operand.vmem [shape: s32[40,6], index: 0, kind: input, shape index: {}]
  %s1 = inlined_call_operand.vmem [shape: f32[202,40], index: 1, kind: input, shape index: {}]
  %s2 = inlined_call_operand.vmem [shape: f32[144,576], index: 2, kind: input, shape index: {}]
  %s3 = inlined_call_operand.vmem [shape: f32[752,32], index: 3, kind: input, shape index: {}]
  %s4 = inlined_call_operand.hbm [shape: f32[4,16], index: 4, kind: output, shape index: {}]
  %s5 = sld [smem:[#allocation0]]
  $region26: #{rim_forward.1} parent=0
    _
  %s7 = ssub.s32 1, %s5
  %s8 = scalar_select 0, %s7, %s5
  $region1: #{rim_forward.1} parent=0
    #allocation4 [shape = 'u8[2048]{0}', space=vmem, size = 0x800, scoped, tag = 'output window, operand 0, single buffered']
    #allocation5 [shape = 's32[1]{0}', space=sflag, size = 0x4, scoped, tag = 'scoped memory for rim_forward.1']
    %9 = vsyncpa [#allocation5], 0
    // Predicated region
    $region2: #{rim_forward.1} parent=1 // pred_check
      _
    $region3: #{rim_forward.1} parent=1 // pred_check_branch
      %11 = sbr.rel (0) target = $region5
    $region4: #{rim_forward.1} parent=1 // pred_region
      _
    $region5: #{rim_forward.1} parent=1 // pred_fallthru
      _
    // Predicated region
    $region6: #{rim_forward.1} parent=1 // pred_check
      _
    $region7: #{rim_forward.1} parent=1 // pred_check_branch
      %13 = sbr.rel (0) target = $region9
    $region8: #{rim_forward.1} parent=1 // pred_region
      _
    $region9: #{rim_forward.1} parent=1 // pred_fallthru
      _
    // Predicated region
    $region10: #{rim_forward.1} parent=1 // pred_check
      _
    $region11: #{rim_forward.1} parent=1 // pred_check_branch
      %15 = sbr.rel (0) target = $region13
    $region12: #{rim_forward.1} parent=1 // pred_region
      _
    $region13: #{rim_forward.1} parent=1 // pred_fallthru
      _
    // Predicated region
    $region14: #{rim_forward.1} parent=1 // pred_check
      _
    $region15: #{rim_forward.1} parent=1 // pred_check_branch
      %17 = sbr.rel (0) target = $region17
    $region16: #{rim_forward.1} parent=1 // pred_region
      _
    $region17: #{rim_forward.1} parent=1 // pred_fallthru
      _
    %v18 = vlaneseq
    %v19 = vand.u32 %v18, 127
    %v20 = vadd.s32 %v19, 128
    %v21 = vld [vmem:[%s0] sm:$0xff]
    %v22 = vld [vmem:[%s0 + $0x8] sm:$0xff]
    %v23 = vld [vmem:[%s0 + $0x10] sm:$0xff]
    %v24 = vld [vmem:[%s0 + $0x18] sm:$0xff]
    %v25 = vld [vmem:[%s0 + $0x20] sm:$0xff]
    %26 = vset.pattern.permute.xlu0 0
    %27 = vperm.xlu0 %26, %v21
    %v28 = vpop.permute.xlu0 %27
    %29 = vset.pattern.permute.xlu0 0
    %30 = vperm.xlu0 %29, %v22
    %v31 = vpop.permute.xlu0 %30
    %32 = vset.pattern.permute.xlu0 0
    %33 = vperm.xlu0 %32, %v23
    %v34 = vpop.permute.xlu0 %33
    %35 = vset.pattern.permute.xlu0 0
    %36 = vperm.xlu0 %35, %v24
    %v37 = vpop.permute.xlu0 %36
    %38 = vset.pattern.permute.xlu0 0
    %39 = vperm.xlu0 %38, %v25
    %v40 = vpop.permute.xlu0 %39
    %vm41 = vcmp.eq.s32.totalorder %v28, %v19
    %vm42 = vcmp.eq.s32.totalorder %v28, %v20
    %vm43 = vcmp.eq.s32.totalorder %v31, %v19
    %vm44 = vcmp.eq.s32.totalorder %v31, %v20
    %vm45 = vcmp.eq.s32.totalorder %v34, %v19
    %vm46 = vcmp.eq.s32.totalorder %v34, %v20
    %vm47 = vcmp.eq.s32.totalorder %v37, %v19
    %vm48 = vcmp.eq.s32.totalorder %v37, %v20
    %vm49 = vcmp.eq.s32.totalorder %v40, %v19
    %vm50 = vcmp.eq.s32.totalorder %v40, %v20
    %v51 = vsel %vm41, 1.0, 0.0
    %v52 = vsel %vm42, 1.0, 0.0
    %v53 = vsel %vm43, 1.0, 0.0
    %v54 = vsel %vm44, 1.0, 0.0
    %v55 = vsel %vm45, 1.0, 0.0
    %v56 = vsel %vm46, 1.0, 0.0
    %v57 = vsel %vm47, 1.0, 0.0
    %v58 = vsel %vm48, 1.0, 0.0
    %v59 = vsel %vm49, 1.0, 0.0
    %v60 = vsel %vm50, 1.0, 0.0
    %v61 = vadd.f32 %v51, 0.0
    %v62 = vadd.f32 %v52, 0.0
    %v63 = vadd.f32 %v53, 0.0
    %v64 = vadd.f32 %v54, 0.0
    %v65 = vadd.f32 %v55, 0.0
    %v66 = vadd.f32 %v56, 0.0
    %v67 = vadd.f32 %v57, 0.0
    %v68 = vadd.f32 %v58, 0.0
    %v69 = vadd.f32 %v59, 0.0
    %v70 = vadd.f32 %v60, 0.0
    %71 = vset.pattern.permute.xlu0 1
    %72 = vperm.xlu0 %71, %v21
    %v73 = vpop.permute.xlu0 %72
    %74 = vset.pattern.permute.xlu0 1
    %75 = vperm.xlu0 %74, %v22
    %v76 = vpop.permute.xlu0 %75
    %77 = vset.pattern.permute.xlu0 1
    %78 = vperm.xlu0 %77, %v23
    %v79 = vpop.permute.xlu0 %78
    %80 = vset.pattern.permute.xlu0 1
    %81 = vperm.xlu0 %80, %v24
    %v82 = vpop.permute.xlu0 %81
    %83 = vset.pattern.permute.xlu0 1
    %84 = vperm.xlu0 %83, %v25
    %v85 = vpop.permute.xlu0 %84
    %vm86 = vcmp.eq.s32.totalorder %v73, %v19
    %vm87 = vcmp.eq.s32.totalorder %v73, %v20
    %vm88 = vcmp.eq.s32.totalorder %v76, %v19
    %vm89 = vcmp.eq.s32.totalorder %v76, %v20
    %vm90 = vcmp.eq.s32.totalorder %v79, %v19
    %vm91 = vcmp.eq.s32.totalorder %v79, %v20
    %vm92 = vcmp.eq.s32.totalorder %v82, %v19
    %vm93 = vcmp.eq.s32.totalorder %v82, %v20
    %vm94 = vcmp.eq.s32.totalorder %v85, %v19
    %vm95 = vcmp.eq.s32.totalorder %v85, %v20
    %v96 = vsel %vm86, 1.0, 0.0
    %v97 = vsel %vm87, 1.0, 0.0
    %v98 = vsel %vm88, 1.0, 0.0
    %v99 = vsel %vm89, 1.0, 0.0
    %v100 = vsel %vm90, 1.0, 0.0
    %v101 = vsel %vm91, 1.0, 0.0
    %v102 = vsel %vm92, 1.0, 0.0
    %v103 = vsel %vm93, 1.0, 0.0
    %v104 = vsel %vm94, 1.0, 0.0
    %v105 = vsel %vm95, 1.0, 0.0
    %v106 = vadd.f32 %v61, %v96
    %v107 = vadd.f32 %v62, %v97
    %v108 = vadd.f32 %v63, %v98
    %v109 = vadd.f32 %v64, %v99
    %v110 = vadd.f32 %v65, %v100
    %v111 = vadd.f32 %v66, %v101
    %v112 = vadd.f32 %v67, %v102
    %v113 = vadd.f32 %v68, %v103
    %v114 = vadd.f32 %v69, %v104
    %v115 = vadd.f32 %v70, %v105
    %116 = vset.pattern.permute.xlu0 2
    %117 = vperm.xlu0 %116, %v21
    %v118 = vpop.permute.xlu0 %117
    %119 = vset.pattern.permute.xlu0 2
    %120 = vperm.xlu0 %119, %v22
    %v121 = vpop.permute.xlu0 %120
    %122 = vset.pattern.permute.xlu0 2
    %123 = vperm.xlu0 %122, %v23
    %v124 = vpop.permute.xlu0 %123
    %125 = vset.pattern.permute.xlu0 2
    %126 = vperm.xlu0 %125, %v24
    %v127 = vpop.permute.xlu0 %126
    %128 = vset.pattern.permute.xlu0 2
    %129 = vperm.xlu0 %128, %v25
    %v130 = vpop.permute.xlu0 %129
    %vm131 = vcmp.eq.s32.totalorder %v118, %v19
    %vm132 = vcmp.eq.s32.totalorder %v118, %v20
    %vm133 = vcmp.eq.s32.totalorder %v121, %v19
    %vm134 = vcmp.eq.s32.totalorder %v121, %v20
    %vm135 = vcmp.eq.s32.totalorder %v124, %v19
    %vm136 = vcmp.eq.s32.totalorder %v124, %v20
    %vm137 = vcmp.eq.s32.totalorder %v127, %v19
    %vm138 = vcmp.eq.s32.totalorder %v127, %v20
    %vm139 = vcmp.eq.s32.totalorder %v130, %v19
    %vm140 = vcmp.eq.s32.totalorder %v130, %v20
    %v141 = vsel %vm131, 1.0, 0.0
    %v142 = vsel %vm132, 1.0, 0.0
    %v143 = vsel %vm133, 1.0, 0.0
    %v144 = vsel %vm134, 1.0, 0.0
    %v145 = vsel %vm135, 1.0, 0.0
    %v146 = vsel %vm136, 1.0, 0.0
    %v147 = vsel %vm137, 1.0, 0.0
    %v148 = vsel %vm138, 1.0, 0.0
    %v149 = vsel %vm139, 1.0, 0.0
    %v150 = vsel %vm140, 1.0, 0.0
    %v151 = vadd.f32 %v106, %v141
    %v152 = vadd.f32 %v107, %v142
    %v153 = vadd.f32 %v108, %v143
    %v154 = vadd.f32 %v109, %v144
    %v155 = vadd.f32 %v110, %v145
    %v156 = vadd.f32 %v111, %v146
    %v157 = vadd.f32 %v112, %v147
    %v158 = vadd.f32 %v113, %v148
    %v159 = vadd.f32 %v114, %v149
    %v160 = vadd.f32 %v115, %v150
    %161 = vset.pattern.permute.xlu0 3
    %162 = vperm.xlu0 %161, %v21
    %v163 = vpop.permute.xlu0 %162
    %164 = vset.pattern.permute.xlu0 3
    %165 = vperm.xlu0 %164, %v22
    %v166 = vpop.permute.xlu0 %165
    %167 = vset.pattern.permute.xlu0 3
    %168 = vperm.xlu0 %167, %v23
    %v169 = vpop.permute.xlu0 %168
    %170 = vset.pattern.permute.xlu0 3
    %171 = vperm.xlu0 %170, %v24
    %v172 = vpop.permute.xlu0 %171
    %173 = vset.pattern.permute.xlu0 3
    %174 = vperm.xlu0 %173, %v25
    %v175 = vpop.permute.xlu0 %174
    %vm176 = vcmp.eq.s32.totalorder %v163, %v19
    %vm177 = vcmp.eq.s32.totalorder %v163, %v20
    %vm178 = vcmp.eq.s32.totalorder %v166, %v19
    %vm179 = vcmp.eq.s32.totalorder %v166, %v20
    %vm180 = vcmp.eq.s32.totalorder %v169, %v19
    %vm181 = vcmp.eq.s32.totalorder %v169, %v20
    %vm182 = vcmp.eq.s32.totalorder %v172, %v19
    %vm183 = vcmp.eq.s32.totalorder %v172, %v20
    %vm184 = vcmp.eq.s32.totalorder %v175, %v19
    %vm185 = vcmp.eq.s32.totalorder %v175, %v20
    %v186 = vsel %vm176, 1.0, 0.0
    %v187 = vsel %vm177, 1.0, 0.0
    %v188 = vsel %vm178, 1.0, 0.0
    %v189 = vsel %vm179, 1.0, 0.0
    %v190 = vsel %vm180, 1.0, 0.0
    %v191 = vsel %vm181, 1.0, 0.0
    %v192 = vsel %vm182, 1.0, 0.0
    %v193 = vsel %vm183, 1.0, 0.0
    %v194 = vsel %vm184, 1.0, 0.0
    %v195 = vsel %vm185, 1.0, 0.0
    %v196 = vadd.f32 %v151, %v186
    %v197 = vadd.f32 %v152, %v187
    %v198 = vadd.f32 %v153, %v188
    %v199 = vadd.f32 %v154, %v189
    %v200 = vadd.f32 %v155, %v190
    %v201 = vadd.f32 %v156, %v191
    %v202 = vadd.f32 %v157, %v192
    %v203 = vadd.f32 %v158, %v193
    %v204 = vadd.f32 %v159, %v194
    %v205 = vadd.f32 %v160, %v195
    %206 = vset.pattern.permute.xlu0 4
    %207 = vperm.xlu0 %206, %v21
    %v208 = vpop.permute.xlu0 %207
    %209 = vset.pattern.permute.xlu0 4
    %210 = vperm.xlu0 %209, %v22
    %v211 = vpop.permute.xlu0 %210
    %212 = vset.pattern.permute.xlu0 4
    %213 = vperm.xlu0 %212, %v23
    %v214 = vpop.permute.xlu0 %213
    %215 = vset.pattern.permute.xlu0 4
    %216 = vperm.xlu0 %215, %v24
    %v217 = vpop.permute.xlu0 %216
    %218 = vset.pattern.permute.xlu0 4
    %219 = vperm.xlu0 %218, %v25
    %v220 = vpop.permute.xlu0 %219
    %vm221 = vcmp.eq.s32.totalorder %v208, %v19
    %vm222 = vcmp.eq.s32.totalorder %v208, %v20
    %vm223 = vcmp.eq.s32.totalorder %v211, %v19
    %vm224 = vcmp.eq.s32.totalorder %v211, %v20
    %vm225 = vcmp.eq.s32.totalorder %v214, %v19
    %vm226 = vcmp.eq.s32.totalorder %v214, %v20
    %vm227 = vcmp.eq.s32.totalorder %v217, %v19
    %vm228 = vcmp.eq.s32.totalorder %v217, %v20
    %vm229 = vcmp.eq.s32.totalorder %v220, %v19
    %vm230 = vcmp.eq.s32.totalorder %v220, %v20
    %v231 = vsel %vm221, 1.0, 0.0
    %v232 = vsel %vm222, 1.0, 0.0
    %v233 = vsel %vm223, 1.0, 0.0
    %v234 = vsel %vm224, 1.0, 0.0
    %v235 = vsel %vm225, 1.0, 0.0
    %v236 = vsel %vm226, 1.0, 0.0
    %v237 = vsel %vm227, 1.0, 0.0
    %v238 = vsel %vm228, 1.0, 0.0
    %v239 = vsel %vm229, 1.0, 0.0
    %v240 = vsel %vm230, 1.0, 0.0
    %v241 = vadd.f32 %v196, %v231
    %v242 = vadd.f32 %v197, %v232
    %v243 = vadd.f32 %v198, %v233
    %v244 = vadd.f32 %v199, %v234
    %v245 = vadd.f32 %v200, %v235
    %v246 = vadd.f32 %v201, %v236
    %v247 = vadd.f32 %v202, %v237
    %v248 = vadd.f32 %v203, %v238
    %v249 = vadd.f32 %v204, %v239
    %v250 = vadd.f32 %v205, %v240
    %v251 = vld [vmem:[%s1] sm:$0xff]
    %v252 = vld [vmem:[%s1 + $0x8] sm:$0xff]
    %v253 = vld [vmem:[%s1 + $0x10] sm:$0xff]
    %v254 = vld [vmem:[%s1 + $0x18] sm:$0xff]
    %v255 = vld [vmem:[%s1 + $0x20] sm:$0xff]
    %v256 = vld [vmem:[%s1 + $0x28] sm:$0xff]
    %v257 = vld [vmem:[%s1 + $0x30] sm:$0xff]
    %v258 = vld [vmem:[%s1 + $0x38] sm:$0xff]
    %v259 = vld [vmem:[%s1 + $0x40] sm:$0xff]
    %v260 = vld [vmem:[%s1 + $0x48] sm:$0xff]
    %v261 = vld [vmem:[%s1 + $0x50] sm:$0xff]
    %v262 = vld [vmem:[%s1 + $0x58] sm:$0xff]
    %v263 = vld [vmem:[%s1 + $0x60] sm:$0xff]
    %v264 = vld [vmem:[%s1 + $0x68] sm:$0xff]
    %v265 = vld [vmem:[%s1 + $0x70] sm:$0xff]
    %v266 = vld [vmem:[%s1 + $0x78] sm:$0xff]
    %v267 = vld [vmem:[%s1 + $0x80] sm:$0xff]
    %v268 = vld [vmem:[%s1 + $0x88] sm:$0xff]
    %v269 = vld [vmem:[%s1 + $0x90] sm:$0xff]
    %v270 = vld [vmem:[%s1 + $0x98] sm:$0xff]
    %v271 = vld [vmem:[%s1 + $0xa0] sm:$0xff]
    %v272 = vld [vmem:[%s1 + $0xa8] sm:$0xff]
    %v273 = vld [vmem:[%s1 + $0xb0] sm:$0xff]
    %v274 = vld [vmem:[%s1 + $0xb8] sm:$0xff]
    %v275 = vld [vmem:[%s1 + $0xc0] sm:$0xff]
    %v276 = vld [vmem:[%s1 + $0xc8] sm:$0x3]
    %vm277 = vcmask 605184
    %v279 = vsel %vm277, %v242, 0
    %v282 = vsel %vm277, %v244, 0
    %v285 = vsel %vm277, %v246, 0
    %v288 = vsel %vm277, %v248, 0
    %v291 = vsel %vm277, %v250, 0
    %vm293 = vcmask 1041408
    %v295 = vsel %vm293, %v276, 0
    %297 = vmatprep.subr.mxu0 0.0
    %298 = vmatpush1.msra.mxu0 %v251
    %299 = vmatprep.subr.mxu0 0.0
    %300 = vmatpush1.msra.mxu0 %v252
    %301 = vmatprep.subr.mxu0 0.0
    %302 = vmatpush1.msra.mxu0 %v253
    %303 = vmatprep.subr.mxu0 0.0
    %304 = vmatpush1.msra.mxu0 %v254
    %305 = vmatprep.subr.mxu0 0.0
    %306 = vmatpush1.msra.mxu0 %v255
    %307 = vmatprep.subr.mxu0 0.0
    %308 = vmatpush1.msra.mxu0 %v256
    %309 = vmatprep.subr.mxu0 0.0
    %310 = vmatpush1.msra.mxu0 %v257
    %311 = vmatprep.subr.mxu0 0.0
    %312 = vmatpush1.msra.mxu0 %v258
    %313 = vmatprep.subr.mxu0 0.0
    %314 = vmatpush1.msra.mxu0 %v259
    %315 = vmatprep.subr.mxu0 0.0
    %316 = vmatpush1.msra.mxu0 %v260
    %317 = vmatprep.subr.mxu0 0.0
    %318 = vmatpush1.msra.mxu0 %v261
    %319 = vmatprep.subr.mxu0 0.0
    %320 = vmatpush1.msra.mxu0 %v262
    %321 = vmatprep.subr.mxu0 0.0
    %322 = vmatpush1.msra.mxu0 %v263
    %323 = vmatprep.subr.mxu0 0.0
    %324 = vmatpush1.msra.mxu0 %v264
    %325 = vmatprep.subr.mxu0 0.0
    %326 = vmatpush1.msra.mxu0 %v265
    %327 = vmatprep.subr.mxu0 0.0
    %328 = vmatpush1.msra.mxu0 %v266
    %329 = vmatprep.subr.mxu0 0.0
    %330 = vmatpush1.msra.mxu0 %v267
    %331 = vmatprep.subr.mxu0 0.0
    %332 = vmatpush1.msra.mxu0 %v268
    %333 = vmatprep.subr.mxu0 0.0
    %334 = vmatpush1.msra.mxu0 %v269
    %335 = vmatprep.subr.mxu0 0.0
    %336 = vmatpush1.msra.mxu0 %v270
    %337 = vmatprep.subr.mxu0 0.0
    %338 = vmatpush1.msra.mxu0 %v271
    %339 = vmatprep.subr.mxu0 0.0
    %340 = vmatpush1.msra.mxu0 %v272
    %341 = vmatprep.subr.mxu0 0.0
    %342 = vmatpush1.msra.mxu0 %v273
    %343 = vmatprep.subr.mxu0 0.0
    %344 = vmatpush1.msra.mxu0 %v274
    %345 = vmatprep.subr.mxu0 0.0
    %346 = vmatpush1.msra.mxu0 %v275
    %347 = vmatprep.subr.mxu0 0.0
    %348 = vmatpush1.msra.mxu0 %v295
    %349 = vmatprep.subr.mxu0 0.0
    %350 = vmatpush1.msra.mxu0 0.0
    %351 = vmatprep.subr.mxu0 0.0
    %352 = vmatpush1.msra.mxu0 0.0
    %353 = vmatprep.subr.mxu0 0.0
    %354 = vmatpush1.msra.mxu0 0.0
    %355 = vmatprep.subr.mxu0 0.0
    %356 = vmatpush1.msra.mxu0 0.0
    %357 = vmatprep.subr.mxu0 0.0
    %358 = vmatpush1.msra.mxu0 0.0
    %359 = vmatprep.subr.mxu0 0.0
    %360 = vmatpush1.msra.mxu0 0.0
    %361 = vmatprep.mubr.f32.mxu0 %v279
    %362 = vmatmul.mubr.f32.gmra.mrb[0].mxu0 %v241
    %v363 = vpop.f32.mrb[0].mxu0
    %v364 = vadd.f32 0.0, %v363
    %v365 = vpop.f32.mrb[0].mxu0
    %366 = vmatprep.mubr.f32.mxu0 %v282
    %367 = vmatmul.mubr.f32.gmra.mrb[0].mxu0 %v243
    %v368 = vpop.f32.mrb[0].mxu0
    %v369 = vadd.f32 0.0, %v368
    %v370 = vpop.f32.mrb[0].mxu0
    %371 = vmatprep.mubr.f32.mxu0 %v285
    %372 = vmatmul.mubr.f32.gmra.mrb[0].mxu0 %v245
    %v373 = vpop.f32.mrb[0].mxu0
    %v374 = vadd.f32 0.0, %v373
    %v375 = vpop.f32.mrb[0].mxu0
    %376 = vmatprep.mubr.f32.mxu0 %v288
    %377 = vmatmul.mubr.f32.gmra.mrb[0].mxu0 %v247
    %v378 = vpop.f32.mrb[0].mxu0
    %v379 = vadd.f32 0.0, %v378
    %v380 = vpop.f32.mrb[0].mxu0
    %381 = vmatprep.mubr.f32.mxu0 %v291
    %382 = vmatmul.mubr.f32.gmra.mrb[0].mxu0 %v249
    %v383 = vpop.f32.mrb[0].mxu0
    %v384 = vadd.f32 0.0, %v383
    %v385 = vpop.f32.mrb[0].mxu0
    %386 = vdwg.mxu0
    %vm387 = vcmask 257024
    %388 = vst.msk [vmem:[#allocation2] sm:$0xf] %vm387, %v364
    %v389 = vld [vmem:[%s3] sm:$0xff]
    %v390 = vld [vmem:[%s3 + $0x8] sm:$0xff]
    %v391 = vld [vmem:[%s3 + $0x10] sm:$0xff]
    %v392 = vld [vmem:[%s3 + $0x18] sm:$0xff]
    %vm393 = vcmask 261120
    %v395 = vsel %vm393, %v364, 0
    %397 = vmatprep.subr.mxu0 0.0
    %398 = vmatpush1.msra.mxu0 %v389
    %399 = vmatprep.subr.mxu0 0.0
    %400 = vmatpush1.msra.mxu0 %v390
    %401 = vmatprep.subr.mxu0 0.0
    %402 = vmatpush1.msra.mxu0 %v391
    %403 = vmatprep.subr.mxu0 0.0
    %404 = vmatpush1.msra.mxu0 %v392
    %405 = vmatprep.subr.mxu0 0.0
    %406 = vmatpush1.msra.mxu0 0.0
    %407 = vmatprep.subr.mxu0 0.0
    %408 = vmatpush1.msra.mxu0 0.0
    %409 = vmatprep.subr.mxu0 0.0
    %410 = vmatpush1.msra.mxu0 0.0
    %411 = vmatprep.subr.mxu0 0.0
    %412 = vmatpush1.msra.mxu0 0.0
    %413 = vmatprep.subr.mxu0 0.0
    %414 = vmatpush1.msra.mxu0 0.0
    %415 = vmatprep.subr.mxu0 0.0
    %416 = vmatpush1.msra.mxu0 0.0
    %417 = vmatprep.subr.mxu0 0.0
    %418 = vmatpush1.msra.mxu0 0.0
    %419 = vmatprep.subr.mxu0 0.0
    %420 = vmatpush1.msra.mxu0 0.0
    %421 = vmatprep.subr.mxu0 0.0
    %422 = vmatpush1.msra.mxu0 0.0
    %423 = vmatprep.subr.mxu0 0.0
    %424 = vmatpush1.msra.mxu0 0.0
    %425 = vmatprep.subr.mxu0 0.0
    %426 = vmatpush1.msra.mxu0 0.0
    %427 = vmatprep.subr.mxu0 0.0
    %428 = vmatpush1.msra.mxu0 0.0
    %429 = vmatprep.subr.mxu0 0.0
    %430 = vmatpush1.msra.mxu0 0.0
    %431 = vmatprep.subr.mxu0 0.0
    %432 = vmatpush1.msra.mxu0 0.0
    %433 = vmatprep.subr.mxu0 0.0
    %434 = vmatpush1.msra.mxu0 0.0
    %435 = vmatprep.subr.mxu0 0.0
    %436 = vmatpush1.msra.mxu0 0.0
    %437 = vmatprep.subr.mxu0 0.0
    %438 = vmatpush1.msra.mxu0 0.0
    %439 = vmatprep.subr.mxu0 0.0
    %440 = vmatpush1.msra.mxu0 0.0
    %441 = vmatprep.subr.mxu0 0.0
    %442 = vmatpush1.msra.mxu0 0.0
    %443 = vmatprep.subr.mxu0 0.0
    %444 = vmatpush1.msra.mxu0 0.0
    %445 = vmatprep.subr.mxu0 0.0
    %446 = vmatpush1.msra.mxu0 0.0
    %447 = vmatprep.subr.mxu0 0.0
    %448 = vmatpush1.msra.mxu0 0.0
    %449 = vmatprep.subr.mxu0 0.0
    %450 = vmatpush1.msra.mxu0 0.0
    %451 = vmatprep.subr.mxu0 0.0
    %452 = vmatpush1.msra.mxu0 0.0
    %453 = vmatprep.subr.mxu0 0.0
    %454 = vmatpush1.msra.mxu0 0.0
    %455 = vmatprep.subr.mxu0 0.0
    %456 = vmatpush1.msra.mxu0 0.0
    %457 = vmatprep.subr.mxu0 0.0
    %458 = vmatpush1.msra.mxu0 0.0
    %459 = vmatprep.subr.mxu0 0.0
    %460 = vmatpush1.msra.mxu0 0.0
    %461 = vmatprep.mubr.f32.mxu0 0.0
    %462 = vmatmul.mubr.f32.gmra.mrb[0].mxu0 %v395
    %v463 = vpop.f32.mrb[0].mxu0
    %v464 = vadd.f32 0.0, %v463
    %v465 = vpop.f32.mrb[0].mxu0
    %466 = vdwg.mxu0
    %v468 = vsel %vm393, %v464, 0
    %v471 = vsel %vm393, %v369, 0
    %v474 = vsel %vm393, %v374, 0
    %v477 = vsel %vm393, %v379, 0
    %v480 = vsel %vm393, %v384, 0
    %482 = vmatprep.subr.mxu0 0.0
    %483 = vmatpush1.xpose.msra.mxu0 %v471
    %484 = vmatprep.subr.mxu0 0.0
    %485 = vmatpush1.xpose.msra.mxu0 %v474
    %486 = vmatprep.subr.mxu0 0.0
    %487 = vmatpush1.xpose.msra.mxu0 %v477
    %488 = vmatprep.subr.mxu0 0.0
    %489 = vmatpush1.xpose.msra.mxu0 %v480
    %490 = vmatprep.subr.mxu0 0.0
    %491 = vmatpush1.xpose.msra.mxu0 0.0
    %492 = vmatprep.subr.mxu0 0.0
    %493 = vmatpush1.xpose.msra.mxu0 0.0
    %494 = vmatprep.subr.mxu0 0.0
    %495 = vmatpush1.xpose.msra.mxu0 0.0
    %496 = vmatprep.subr.mxu0 0.0
    %497 = vmatpush1.xpose.msra.mxu0 0.0
    %498 = vmatprep.subr.mxu0 0.0
    %499 = vmatpush1.xpose.msra.mxu0 0.0
    %500 = vmatprep.subr.mxu0 0.0
    %501 = vmatpush1.xpose.msra.mxu0 0.0
    %502 = vmatprep.subr.mxu0 0.0
    %503 = vmatpush1.xpose.msra.mxu0 0.0
    %504 = vmatprep.subr.mxu0 0.0
    %505 = vmatpush1.xpose.msra.mxu0 0.0
    %506 = vmatprep.subr.mxu0 0.0
    %507 = vmatpush1.xpose.msra.mxu0 0.0
    %508 = vmatprep.subr.mxu0 0.0
    %509 = vmatpush1.xpose.msra.mxu0 0.0
    %510 = vmatprep.subr.mxu0 0.0
    %511 = vmatpush1.xpose.msra.mxu0 0.0
    %512 = vmatprep.subr.mxu0 0.0
    %513 = vmatpush1.xpose.msra.mxu0 0.0
    %514 = vmatprep.subr.mxu0 0.0
    %515 = vmatpush1.xpose.msra.mxu0 0.0
    %516 = vmatprep.subr.mxu0 0.0
    %517 = vmatpush1.xpose.msra.mxu0 0.0
    %518 = vmatprep.subr.mxu0 0.0
    %519 = vmatpush1.xpose.msra.mxu0 0.0
    %520 = vmatprep.subr.mxu0 0.0
    %521 = vmatpush1.xpose.msra.mxu0 0.0
    %522 = vmatprep.subr.mxu0 0.0
    %523 = vmatpush1.xpose.msra.mxu0 0.0
    %524 = vmatprep.subr.mxu0 0.0
    %525 = vmatpush1.xpose.msra.mxu0 0.0
    %526 = vmatprep.subr.mxu0 0.0
    %527 = vmatpush1.xpose.msra.mxu0 0.0
    %528 = vmatprep.subr.mxu0 0.0
    %529 = vmatpush1.xpose.msra.mxu0 0.0
    %530 = vmatprep.subr.mxu0 0.0
    %531 = vmatpush1.xpose.msra.mxu0 0.0
    %532 = vmatprep.subr.mxu0 0.0
    %533 = vmatpush1.xpose.msra.mxu0 0.0
    %534 = vmatprep.subr.mxu0 0.0
    %535 = vmatpush1.xpose.msra.mxu0 0.0
    %536 = vmatprep.subr.mxu0 0.0
    %537 = vmatpush1.xpose.msra.mxu0 0.0
    %538 = vmatprep.subr.mxu0 0.0
    %539 = vmatpush1.xpose.msra.mxu0 0.0
    %540 = vmatprep.subr.mxu0 0.0
    %541 = vmatpush1.xpose.msra.mxu0 0.0
    %542 = vmatprep.subr.mxu0 0.0
    %543 = vmatpush1.xpose.msra.mxu0 0.0
    %544 = vmatprep.subr.mxu0 0.0
    %545 = vmatpush1.xpose.msra.mxu0 0.0
    %546 = vmatprep.mubr.f32.mxu0 0.0
    %547 = vmatmul.mubr.f32.gmra.mrb[0].mxu0 %v468
    %v548 = vpop.f32.mrb[0].mxu0
    %v549 = vadd.f32 0.0, %v548
    %v550 = vpop.f32.mrb[0].mxu0
    %551 = vdwg.mxu0
    %v552 = vmul.f32 %v549, 0.17677669
    %v553 = vlaneseq
    %v554 = vshrl.u32 %v553, 7
    %v555 = vmul.u32 %v554, 8
    %v556 = vld [vmem:[%s0] sm:$0xf]
    %vm557 = vcmp.ge.s32.totalorder %v19, %v555
    %v558 = vadd.s32 %v555, 8
    %vm559 = vcmp.lt.s32.totalorder %v19, %v558
    %vm560 = vmand %vm557, %vm559
    %561 = vset.pattern.permute.xlu0 5
    %562 = vperm.xlu0 %561, %v556
    %v563 = vpop.permute.xlu0 %562
    %v564 = vadd.s32 %v555, %v563
    %vm565 = vcmp.lt.s32.totalorder %v19, %v564
    %vm566 = vmand %vm557, %vm565
    %v567 = vsel %vm560, -1000000.0, -1e+30
    %v568 = vsel %vm566, %v552, %v567
    %v569 = vsel %vm387, %v568, -inf
    %570 = vmax.xlane.f32.xlu0 %v569
    %v571 = vpop.xlane.xlu0 %570
    %v572 = vsub.f32 %v568, %v571
    %v573 = vmul.f32 %v572, 1.442695
    %v574 = vpow.pop %v573
    %v575 = vsel %vm387, %v574, 0.0
    %576 = vadd.xlane.f32.xlu0 %v575
    %v577 = vpop.xlane.xlu0 %576
    %v578 = vrcp.pop %v577
    %v579 = vmul.f32 %v574, %v578
    %v581 = vsel %vm393, %v579, 0
    %583 = vmatprep.subr.mxu0 0.0
    %584 = vmatpush1.msra.mxu0 %v369
    %585 = vmatprep.subr.mxu0 0.0
    %586 = vmatpush1.msra.mxu0 %v374
    %587 = vmatprep.subr.mxu0 0.0
    %588 = vmatpush1.msra.mxu0 %v379
    %589 = vmatprep.subr.mxu0 0.0
    %590 = vmatpush1.msra.mxu0 %v384
    %591 = vmatprep.subr.mxu0 0.0
    %592 = vmatpush1.msra.mxu0 0.0
    %593 = vmatprep.subr.mxu0 0.0
    %594 = vmatpush1.msra.mxu0 0.0
    %595 = vmatprep.subr.mxu0 0.0
    %596 = vmatpush1.msra.mxu0 0.0
    %597 = vmatprep.subr.mxu0 0.0
    %598 = vmatpush1.msra.mxu0 0.0
    %599 = vmatprep.subr.mxu0 0.0
    %600 = vmatpush1.msra.mxu0 0.0
    %601 = vmatprep.subr.mxu0 0.0
    %602 = vmatpush1.msra.mxu0 0.0
    %603 = vmatprep.subr.mxu0 0.0
    %604 = vmatpush1.msra.mxu0 0.0
    %605 = vmatprep.subr.mxu0 0.0
    %606 = vmatpush1.msra.mxu0 0.0
    %607 = vmatprep.subr.mxu0 0.0
    %608 = vmatpush1.msra.mxu0 0.0
    %609 = vmatprep.subr.mxu0 0.0
    %610 = vmatpush1.msra.mxu0 0.0
    %611 = vmatprep.subr.mxu0 0.0
    %612 = vmatpush1.msra.mxu0 0.0
    %613 = vmatprep.subr.mxu0 0.0
    %614 = vmatpush1.msra.mxu0 0.0
    %615 = vmatprep.subr.mxu0 0.0
    %616 = vmatpush1.msra.mxu0 0.0
    %617 = vmatprep.subr.mxu0 0.0
    %618 = vmatpush1.msra.mxu0 0.0
    %619 = vmatprep.subr.mxu0 0.0
    %620 = vmatpush1.msra.mxu0 0.0
    %621 = vmatprep.subr.mxu0 0.0
    %622 = vmatpush1.msra.mxu0 0.0
    %623 = vmatprep.subr.mxu0 0.0
    %624 = vmatpush1.msra.mxu0 0.0
    %625 = vmatprep.subr.mxu0 0.0
    %626 = vmatpush1.msra.mxu0 0.0
    %627 = vmatprep.subr.mxu0 0.0
    %628 = vmatpush1.msra.mxu0 0.0
    %629 = vmatprep.subr.mxu0 0.0
    %630 = vmatpush1.msra.mxu0 0.0
    %631 = vmatprep.subr.mxu0 0.0
    %632 = vmatpush1.msra.mxu0 0.0
    %633 = vmatprep.subr.mxu0 0.0
    %634 = vmatpush1.msra.mxu0 0.0
    %635 = vmatprep.subr.mxu0 0.0
    %636 = vmatpush1.msra.mxu0 0.0
    %637 = vmatprep.subr.mxu0 0.0
    %638 = vmatpush1.msra.mxu0 0.0
    %639 = vmatprep.subr.mxu0 0.0
    %640 = vmatpush1.msra.mxu0 0.0
    %641 = vmatprep.subr.mxu0 0.0
    %642 = vmatpush1.msra.mxu0 0.0
    %643 = vmatprep.subr.mxu0 0.0
    %644 = vmatpush1.msra.mxu0 0.0
    %645 = vmatprep.subr.mxu0 0.0
    %646 = vmatpush1.msra.mxu0 0.0
    %647 = vmatprep.mubr.f32.mxu0 0.0
    %648 = vmatmul.mubr.f32.gmra.mrb[0].mxu0 %v581
    %v649 = vpop.f32.mrb[0].mxu0
    %v650 = vadd.f32 0.0, %v649
    %v651 = vpop.f32.mrb[0].mxu0
    %652 = vdwg.mxu0
    %654 = vrot.lane.b32.xlu0 %v650, 32
    %v655 = vpop.permute.xlu0 %654
    %vm657 = vcmask 584960
    %658 = vst.msk [vmem:[#allocation2] sm:$0xf] %vm657, %v655
    %v659 = vld [vmem:[#allocation2] sm:$0xf]
    %v660 = vld [vmem:[%s3 + $0x20] sm:$0xff]
    %v661 = vld [vmem:[%s3 + $0x28] sm:$0xff]
    %v662 = vld [vmem:[%s3 + $0x30] sm:$0xff]
    %v663 = vld [vmem:[%s3 + $0x38] sm:$0xff]
    %v664 = vld [vmem:[%s3 + $0x40] sm:$0xff]
    %v665 = vld [vmem:[%s3 + $0x48] sm:$0xff]
    %v666 = vld [vmem:[%s3 + $0x50] sm:$0xff]
    %v667 = vld [vmem:[%s3 + $0x58] sm:$0xff]
    %v668 = vld [vmem:[%s3 + $0x60] sm:$0xff]
    %v669 = vld [vmem:[%s3 + $0x2a8] sm:$0x1]
    %v670 = vlaneseq
    %v671 = vshrl.u32 %v670, 7
    %v672 = vsub.s32 0, %v671
    %v673 = vrot.slane %v669, %v672
    %vm674 = vcmask 588800
    %v676 = vsel %vm674, %v659, 0
    %678 = vmatprep.subr.mxu0 0.0
    %679 = vmatpush1.msra.mxu0 %v660
    %680 = vmatprep.subr.mxu0 0.0
    %681 = vmatpush1.msra.mxu0 %v661
    %682 = vmatprep.subr.mxu0 0.0
    %683 = vmatpush1.msra.mxu0 %v662
    %684 = vmatprep.subr.mxu0 0.0
    %685 = vmatpush1.msra.mxu0 %v663
    %686 = vmatprep.subr.mxu0 0.0
    %687 = vmatpush1.msra.mxu0 %v664
    %688 = vmatprep.subr.mxu0 0.0
    %689 = vmatpush1.msra.mxu0 %v665
    %690 = vmatprep.subr.mxu0 0.0
    %691 = vmatpush1.msra.mxu0 %v666
    %692 = vmatprep.subr.mxu0 0.0
    %693 = vmatpush1.msra.mxu0 %v667
    %694 = vmatprep.subr.mxu0 0.0
    %695 = vmatpush1.msra.mxu0 %v668
    %696 = vmatprep.subr.mxu0 0.0
    %697 = vmatpush1.msra.mxu0 0.0
    %698 = vmatprep.subr.mxu0 0.0
    %699 = vmatpush1.msra.mxu0 0.0
    %700 = vmatprep.subr.mxu0 0.0
    %701 = vmatpush1.msra.mxu0 0.0
    %702 = vmatprep.subr.mxu0 0.0
    %703 = vmatpush1.msra.mxu0 0.0
    %704 = vmatprep.subr.mxu0 0.0
    %705 = vmatpush1.msra.mxu0 0.0
    %706 = vmatprep.subr.mxu0 0.0
    %707 = vmatpush1.msra.mxu0 0.0
    %708 = vmatprep.subr.mxu0 0.0
    %709 = vmatpush1.msra.mxu0 0.0
    %710 = vmatprep.subr.mxu0 0.0
    %711 = vmatpush1.msra.mxu0 0.0
    %712 = vmatprep.subr.mxu0 0.0
    %713 = vmatpush1.msra.mxu0 0.0
    %714 = vmatprep.subr.mxu0 0.0
    %715 = vmatpush1.msra.mxu0 0.0
    %716 = vmatprep.subr.mxu0 0.0
    %717 = vmatpush1.msra.mxu0 0.0
    %718 = vmatprep.subr.mxu0 0.0
    %719 = vmatpush1.msra.mxu0 0.0
    %720 = vmatprep.subr.mxu0 0.0
    %721 = vmatpush1.msra.mxu0 0.0
    %722 = vmatprep.subr.mxu0 0.0
    %723 = vmatpush1.msra.mxu0 0.0
    %724 = vmatprep.subr.mxu0 0.0
    %725 = vmatpush1.msra.mxu0 0.0
    %726 = vmatprep.subr.mxu0 0.0
    %727 = vmatpush1.msra.mxu0 0.0
    %728 = vmatprep.subr.mxu0 0.0
    %729 = vmatpush1.msra.mxu0 0.0
    %730 = vmatprep.subr.mxu0 0.0
    %731 = vmatpush1.msra.mxu0 0.0
    %732 = vmatprep.subr.mxu0 0.0
    %733 = vmatpush1.msra.mxu0 0.0
    %734 = vmatprep.subr.mxu0 0.0
    %735 = vmatpush1.msra.mxu0 0.0
    %736 = vmatprep.subr.mxu0 0.0
    %737 = vmatpush1.msra.mxu0 0.0
    %738 = vmatprep.subr.mxu0 0.0
    %739 = vmatpush1.msra.mxu0 0.0
    %740 = vmatprep.subr.mxu0 0.0
    %741 = vmatpush1.msra.mxu0 0.0
    %742 = vmatprep.mubr.f32.mxu0 0.0
    %743 = vmatmul.mubr.f32.gmra.mrb[0].mxu0 %v676
    %v744 = vpop.f32.mrb[0].mxu0
    %v745 = vadd.f32 %v673, %v744
    %v746 = vpop.f32.mrb[0].mxu0
    %747 = vdwg.mxu0
    %v748 = vld [vmem:[%s2] sm:$0xff]
    %v749 = vld [vmem:[%s2 + $0x8] sm:$0xff]
    %v750 = vld [vmem:[%s2 + $0x10] sm:$0xff]
    %v751 = vld [vmem:[%s2 + $0x18] sm:$0xff]
    %v752 = vld [vmem:[%s2 + $0x20] sm:$0xff]
    %v753 = vld [vmem:[%s2 + $0x28] sm:$0xff]
    %v754 = vld [vmem:[%s2 + $0x30] sm:$0xff]
    %v755 = vld [vmem:[%s2 + $0x38] sm:$0xff]
    %v756 = vld [vmem:[%s2 + $0x40] sm:$0xff]
    %v757 = vld [vmem:[%s2 + $0x48] sm:$0xff]
    %v758 = vld [vmem:[%s2 + $0x50] sm:$0xff]
    %v759 = vld [vmem:[%s2 + $0x58] sm:$0xff]
    %v760 = vld [vmem:[%s2 + $0x60] sm:$0xff]
    %v761 = vld [vmem:[%s2 + $0x68] sm:$0xff]
    %v762 = vld [vmem:[%s2 + $0x70] sm:$0xff]
    %v763 = vld [vmem:[%s2 + $0x78] sm:$0xff]
    %v764 = vld [vmem:[%s2 + $0x80] sm:$0xff]
    %v765 = vld [vmem:[%s2 + $0x88] sm:$0xff]
    %v766 = vld [vmem:[%s2 + $0x90] sm:$0xff]
    %v767 = vld [vmem:[%s2 + $0x98] sm:$0xff]
    %v768 = vld [vmem:[%s2 + $0xa0] sm:$0xff]
    %v769 = vld [vmem:[%s2 + $0xa8] sm:$0xff]
    %v770 = vld [vmem:[%s2 + $0xb0] sm:$0xff]
    %v771 = vld [vmem:[%s2 + $0xb8] sm:$0xff]
    %v772 = vld [vmem:[%s2 + $0xc0] sm:$0xff]
    %v773 = vld [vmem:[%s2 + $0xc8] sm:$0xff]
    %v774 = vld [vmem:[%s2 + $0xd0] sm:$0xff]
    %v775 = vld [vmem:[%s2 + $0xd8] sm:$0xff]
    %v776 = vld [vmem:[%s2 + $0xe0] sm:$0xff]
    %v777 = vld [vmem:[%s2 + $0xe8] sm:$0xff]
    %v778 = vld [vmem:[%s2 + $0xf0] sm:$0xff]
    %v779 = vld [vmem:[%s2 + $0xf8] sm:$0xff]
    %v780 = vld [vmem:[%s2 + $0x100] sm:$0xff]
    %v781 = vld [vmem:[%s2 + $0x108] sm:$0xff]
    %v782 = vld [vmem:[%s2 + $0x110] sm:$0xff]
    %v783 = vld [vmem:[%s2 + $0x118] sm:$0xff]
    %v784 = vld [vmem:[%s2 + $0x120] sm:$0xff]
    %v785 = vld [vmem:[%s2 + $0x128] sm:$0xff]
    %v786 = vld [vmem:[%s2 + $0x130] sm:$0xff]
    %v787 = vld [vmem:[%s2 + $0x138] sm:$0xff]
    %v788 = vld [vmem:[%s2 + $0x140] sm:$0xff]
    %v789 = vld [vmem:[%s2 + $0x148] sm:$0xff]
    %v790 = vld [vmem:[%s2 + $0x150] sm:$0xff]
    %v791 = vld [vmem:[%s2 + $0x158] sm:$0xff]
    %v792 = vld [vmem:[%s2 + $0x160] sm:$0xff]
    %793 = vmatprep.subr.mxu0 %v749
    %794 = vmatpush1.msra.mxu0 %v748
    %795 = vmatprep.subr.mxu0 %v754
    %796 = vmatpush1.msra.mxu0 %v753
    %797 = vmatprep.subr.mxu0 %v759
    %798 = vmatpush1.msra.mxu0 %v758
    %799 = vmatprep.subr.mxu0 %v764
    %800 = vmatpush1.msra.mxu0 %v763
    %801 = vmatprep.subr.mxu0 %v769
    %802 = vmatpush1.msra.mxu0 %v768
    %803 = vmatprep.subr.mxu0 %v774
    %804 = vmatpush1.msra.mxu0 %v773
    %805 = vmatprep.subr.mxu0 %v779
    %806 = vmatpush1.msra.mxu0 %v778
    %807 = vmatprep.subr.mxu0 %v784
    %808 = vmatpush1.msra.mxu0 %v783
    %809 = vmatprep.subr.mxu0 %v789
    %810 = vmatpush1.msra.mxu0 %v788
    %811 = vmatprep.subr.mxu0 0.0
    %812 = vmatpush1.msra.mxu0 0.0
    %813 = vmatprep.subr.mxu0 0.0
    %814 = vmatpush1.msra.mxu0 0.0
    %815 = vmatprep.subr.mxu0 0.0
    %816 = vmatpush1.msra.mxu0 0.0
    %817 = vmatprep.subr.mxu0 0.0
    %818 = vmatpush1.msra.mxu0 0.0
    %819 = vmatprep.subr.mxu0 0.0
    %820 = vmatpush1.msra.mxu0 0.0
    %821 = vmatprep.subr.mxu0 0.0
    %822 = vmatpush1.msra.mxu0 0.0
    %823 = vmatprep.subr.mxu0 0.0
    %824 = vmatpush1.msra.mxu0 0.0
    %825 = vmatprep.subr.mxu0 0.0
    %826 = vmatpush1.msra.mxu0 0.0
    %827 = vmatprep.subr.mxu0 0.0
    %828 = vmatpush1.msra.mxu0 0.0
    %829 = vmatprep.subr.mxu0 0.0
    %830 = vmatpush1.msra.mxu0 0.0
    %831 = vmatprep.subr.mxu0 0.0
    %832 = vmatpush1.msra.mxu0 0.0
    %833 = vmatprep.subr.mxu0 0.0
    %834 = vmatpush1.msra.mxu0 0.0
    %835 = vmatprep.subr.mxu0 0.0
    %836 = vmatpush1.msra.mxu0 0.0
    %837 = vmatprep.subr.mxu0 0.0
    %838 = vmatpush1.msra.mxu0 0.0
    %839 = vmatprep.subr.mxu0 0.0
    %840 = vmatpush1.msra.mxu0 0.0
    %841 = vmatprep.subr.mxu0 0.0
    %842 = vmatpush1.msra.mxu0 0.0
    %843 = vmatprep.subr.mxu0 0.0
    %844 = vmatpush1.msra.mxu0 0.0
    %845 = vmatprep.subr.mxu0 0.0
    %846 = vmatpush1.msra.mxu0 0.0
    %847 = vmatprep.subr.mxu0 0.0
    %848 = vmatpush1.msra.mxu0 0.0
    %849 = vmatprep.subr.mxu0 0.0
    %850 = vmatpush1.msra.mxu0 0.0
    %851 = vmatprep.subr.mxu0 0.0
    %852 = vmatpush1.msra.mxu0 0.0
    %853 = vmatprep.subr.mxu0 0.0
    %854 = vmatpush1.msra.mxu0 0.0
    %855 = vmatprep.subr.mxu0 0.0
    %856 = vmatpush1.msra.mxu0 0.0
    %857 = vmatprep.mubr.f32.mxu0 0.0
    %858 = vmatmul.mubr.f32.gmra.mrb[0].mxu0 %v676
    %v859 = vpop.f32.mrb[0].mxu0
    %v860 = vadd.f32 0.0, %v859
    %v861 = vpop.f32.mrb[0].mxu0
    %v862 = vadd.f32 0.0, %v861
    %863 = vdwg.mxu0
    %864 = vmatprep.subr.mxu0 %v751
    %865 = vmatpush1.msra.mxu0 %v750
    %866 = vmatprep.subr.mxu0 %v756
    %867 = vmatpush1.msra.mxu0 %v755
    %868 = vmatprep.subr.mxu0 %v761
    %869 = vmatpush1.msra.mxu0 %v760
    %870 = vmatprep.subr.mxu0 %v766
    %871 = vmatpush1.msra.mxu0 %v765
    %872 = vmatprep.subr.mxu0 %v771
    %873 = vmatpush1.msra.mxu0 %v770
    %874 = vmatprep.subr.mxu0 %v776
    %875 = vmatpush1.msra.mxu0 %v775
    %876 = vmatprep.subr.mxu0 %v781
    %877 = vmatpush1.msra.mxu0 %v780
    %878 = vmatprep.subr.mxu0 %v786
    %879 = vmatpush1.msra.mxu0 %v785
    %880 = vmatprep.subr.mxu0 %v791
    %881 = vmatpush1.msra.mxu0 %v790
    %882 = vmatprep.subr.mxu0 0.0
    %883 = vmatpush1.msra.mxu0 0.0
    %884 = vmatprep.subr.mxu0 0.0
    %885 = vmatpush1.msra.mxu0 0.0
    %886 = vmatprep.subr.mxu0 0.0
    %887 = vmatpush1.msra.mxu0 0.0
    %888 = vmatprep.subr.mxu0 0.0
    %889 = vmatpush1.msra.mxu0 0.0
    %890 = vmatprep.subr.mxu0 0.0
    %891 = vmatpush1.msra.mxu0 0.0
    %892 = vmatprep.subr.mxu0 0.0
    %893 = vmatpush1.msra.mxu0 0.0
    %894 = vmatprep.subr.mxu0 0.0
    %895 = vmatpush1.msra.mxu0 0.0
    %896 = vmatprep.subr.mxu0 0.0
    %897 = vmatpush1.msra.mxu0 0.0
    %898 = vmatprep.subr.mxu0 0.0
    %899 = vmatpush1.msra.mxu0 0.0
    %900 = vmatprep.subr.mxu0 0.0
    %901 = vmatpush1.msra.mxu0 0.0
    %902 = vmatprep.subr.mxu0 0.0
    %903 = vmatpush1.msra.mxu0 0.0
    %904 = vmatprep.subr.mxu0 0.0
    %905 = vmatpush1.msra.mxu0 0.0
    %906 = vmatprep.subr.mxu0 0.0
    %907 = vmatpush1.msra.mxu0 0.0
    %908 = vmatprep.subr.mxu0 0.0
    %909 = vmatpush1.msra.mxu0 0.0
    %910 = vmatprep.subr.mxu0 0.0
    %911 = vmatpush1.msra.mxu0 0.0
    %912 = vmatprep.subr.mxu0 0.0
    %913 = vmatpush1.msra.mxu0 0.0
    %914 = vmatprep.subr.mxu0 0.0
    %915 = vmatpush1.msra.mxu0 0.0
    %916 = vmatprep.subr.mxu0 0.0
    %917 = vmatpush1.msra.mxu0 0.0
    %918 = vmatprep.subr.mxu0 0.0
    %919 = vmatpush1.msra.mxu0 0.0
    %920 = vmatprep.subr.mxu0 0.0
    %921 = vmatpush1.msra.mxu0 0.0
    %922 = vmatprep.subr.mxu0 0.0
    %923 = vmatpush1.msra.mxu0 0.0
    %924 = vmatprep.subr.mxu0 0.0
    %925 = vmatpush1.msra.mxu0 0.0
    %926 = vmatprep.subr.mxu0 0.0
    %927 = vmatpush1.msra.mxu0 0.0
    %928 = vmatprep.mubr.f32.mxu0 0.0
    %929 = vmatmul.mubr.f32.gmra.mrb[0].mxu0 %v676
    %v930 = vpop.f32.mrb[0].mxu0
    %v931 = vadd.f32 0.0, %v930
    %v932 = vpop.f32.mrb[0].mxu0
    %v933 = vadd.f32 0.0, %v932
    %934 = vdwg.mxu0
    %935 = vmatprep.subr.mxu0 0.0
    %936 = vmatpush1.msra.mxu0 %v752
    %937 = vmatprep.subr.mxu0 0.0
    %938 = vmatpush1.msra.mxu0 %v757
    %939 = vmatprep.subr.mxu0 0.0
    %940 = vmatpush1.msra.mxu0 %v762
    %941 = vmatprep.subr.mxu0 0.0
    %942 = vmatpush1.msra.mxu0 %v767
    %943 = vmatprep.subr.mxu0 0.0
    %944 = vmatpush1.msra.mxu0 %v772
    %945 = vmatprep.subr.mxu0 0.0
    %946 = vmatpush1.msra.mxu0 %v777
    %947 = vmatprep.subr.mxu0 0.0
    %948 = vmatpush1.msra.mxu0 %v782
    %949 = vmatprep.subr.mxu0 0.0
    %950 = vmatpush1.msra.mxu0 %v787
    %951 = vmatprep.subr.mxu0 0.0
    %952 = vmatpush1.msra.mxu0 %v792
    %953 = vmatprep.subr.mxu0 0.0
    %954 = vmatpush1.msra.mxu0 0.0
    %955 = vmatprep.subr.mxu0 0.0
    %956 = vmatpush1.msra.mxu0 0.0
    %957 = vmatprep.subr.mxu0 0.0
    %958 = vmatpush1.msra.mxu0 0.0
    %959 = vmatprep.subr.mxu0 0.0
    %960 = vmatpush1.msra.mxu0 0.0
    %961 = vmatprep.subr.mxu0 0.0
    %962 = vmatpush1.msra.mxu0 0.0
    %963 = vmatprep.subr.mxu0 0.0
    %964 = vmatpush1.msra.mxu0 0.0
    %965 = vmatprep.subr.mxu0 0.0
    %966 = vmatpush1.msra.mxu0 0.0
    %967 = vmatprep.subr.mxu0 0.0
    %968 = vmatpush1.msra.mxu0 0.0
    %969 = vmatprep.subr.mxu0 0.0
    %970 = vmatpush1.msra.mxu0 0.0
    %971 = vmatprep.subr.mxu0 0.0
    %972 = vmatpush1.msra.mxu0 0.0
    %973 = vmatprep.subr.mxu0 0.0
    %974 = vmatpush1.msra.mxu0 0.0
    %975 = vmatprep.subr.mxu0 0.0
    %976 = vmatpush1.msra.mxu0 0.0
    %977 = vmatprep.subr.mxu0 0.0
    %978 = vmatpush1.msra.mxu0 0.0
    %979 = vmatprep.subr.mxu0 0.0
    %980 = vmatpush1.msra.mxu0 0.0
    %981 = vmatprep.subr.mxu0 0.0
    %982 = vmatpush1.msra.mxu0 0.0
    %983 = vmatprep.subr.mxu0 0.0
    %984 = vmatpush1.msra.mxu0 0.0
    %985 = vmatprep.subr.mxu0 0.0
    %986 = vmatpush1.msra.mxu0 0.0
    %987 = vmatprep.subr.mxu0 0.0
    %988 = vmatpush1.msra.mxu0 0.0
    %989 = vmatprep.subr.mxu0 0.0
    %990 = vmatpush1.msra.mxu0 0.0
    %991 = vmatprep.subr.mxu0 0.0
    %992 = vmatpush1.msra.mxu0 0.0
    %993 = vmatprep.subr.mxu0 0.0
    %994 = vmatpush1.msra.mxu0 0.0
    %995 = vmatprep.subr.mxu0 0.0
    %996 = vmatpush1.msra.mxu0 0.0
    %997 = vmatprep.subr.mxu0 0.0
    %998 = vmatpush1.msra.mxu0 0.0
    %999 = vmatprep.mubr.f32.mxu0 0.0
    %1000 = vmatmul.mubr.f32.gmra.mrb[0].mxu0 %v676
    %v1001 = vpop.f32.mrb[0].mxu0
    %v1002 = vadd.f32 0.0, %v1001
    %v1003 = vpop.f32.mrb[0].mxu0
    %1004 = vdwg.mxu0
    %v1005 = vld [vmem:[%s2 + $0x168] sm:$0xff]
    %v1006 = vld [vmem:[%s2 + $0x170] sm:$0xff]
    %v1007 = vld [vmem:[%s2 + $0x178] sm:$0xff]
    %v1008 = vld [vmem:[%s2 + $0x180] sm:$0xff]
    %v1009 = vld [vmem:[%s2 + $0x188] sm:$0xff]
    %v1010 = vld [vmem:[%s2 + $0x190] sm:$0xff]
    %v1011 = vld [vmem:[%s2 + $0x198] sm:$0xff]
    %v1012 = vld [vmem:[%s2 + $0x1a0] sm:$0xff]
    %v1013 = vld [vmem:[%s2 + $0x1a8] sm:$0xff]
    %v1014 = vld [vmem:[%s2 + $0x1b0] sm:$0xff]
    %v1015 = vld [vmem:[%s2 + $0x1b8] sm:$0xff]
    %v1016 = vld [vmem:[%s2 + $0x1c0] sm:$0xff]
    %v1017 = vld [vmem:[%s2 + $0x1c8] sm:$0xff]
    %v1018 = vld [vmem:[%s2 + $0x1d0] sm:$0xff]
    %v1019 = vld [vmem:[%s2 + $0x1d8] sm:$0xff]
    %v1020 = vld [vmem:[%s2 + $0x1e0] sm:$0xff]
    %v1021 = vld [vmem:[%s2 + $0x1e8] sm:$0xff]
    %v1022 = vld [vmem:[%s2 + $0x1f0] sm:$0xff]
    %v1023 = vld [vmem:[%s2 + $0x1f8] sm:$0xff]
    %v1024 = vld [vmem:[%s2 + $0x200] sm:$0xff]
    %v1025 = vld [vmem:[%s2 + $0x208] sm:$0xff]
    %v1026 = vld [vmem:[%s2 + $0x210] sm:$0xff]
    %v1027 = vld [vmem:[%s2 + $0x218] sm:$0xff]
    %v1028 = vld [vmem:[%s2 + $0x220] sm:$0xff]
    %v1029 = vld [vmem:[%s2 + $0x228] sm:$0xff]
    %v1030 = vld [vmem:[%s2 + $0x230] sm:$0xff]
    %v1031 = vld [vmem:[%s2 + $0x238] sm:$0xff]
    %v1032 = vld [vmem:[%s2 + $0x240] sm:$0xff]
    %v1033 = vld [vmem:[%s2 + $0x248] sm:$0xff]
    %v1034 = vld [vmem:[%s2 + $0x250] sm:$0xff]
    %v1035 = vld [vmem:[%s2 + $0x258] sm:$0xff]
    %v1036 = vld [vmem:[%s2 + $0x260] sm:$0xff]
    %v1037 = vld [vmem:[%s2 + $0x268] sm:$0xff]
    %v1038 = vld [vmem:[%s2 + $0x270] sm:$0xff]
    %v1039 = vld [vmem:[%s2 + $0x278] sm:$0xff]
    %v1040 = vld [vmem:[%s2 + $0x280] sm:$0xff]
    %v1041 = vld [vmem:[%s2 + $0x288] sm:$0xff]
    %v1042 = vld [vmem:[%s2 + $0x290] sm:$0xff]
    %v1043 = vld [vmem:[%s2 + $0x298] sm:$0xff]
    %v1044 = vld [vmem:[%s2 + $0x2a0] sm:$0xff]
    %v1045 = vld [vmem:[%s2 + $0x2a8] sm:$0xff]
    %v1046 = vld [vmem:[%s2 + $0x2b0] sm:$0xff]
    %v1047 = vld [vmem:[%s2 + $0x2b8] sm:$0xff]
    %v1048 = vld [vmem:[%s2 + $0x2c0] sm:$0xff]
    %v1049 = vld [vmem:[%s2 + $0x2c8] sm:$0xff]
    %1050 = vmatprep.subr.mxu0 %v1006
    %1051 = vmatpush1.msra.mxu0 %v1005
    %1052 = vmatprep.subr.mxu0 %v1011
    %1053 = vmatpush1.msra.mxu0 %v1010
    %1054 = vmatprep.subr.mxu0 %v1016
    %1055 = vmatpush1.msra.mxu0 %v1015
    %1056 = vmatprep.subr.mxu0 %v1021
    %1057 = vmatpush1.msra.mxu0 %v1020
    %1058 = vmatprep.subr.mxu0 %v1026
    %1059 = vmatpush1.msra.mxu0 %v1025
    %1060 = vmatprep.subr.mxu0 %v1031
    %1061 = vmatpush1.msra.mxu0 %v1030
    %1062 = vmatprep.subr.mxu0 %v1036
    %1063 = vmatpush1.msra.mxu0 %v1035
    %1064 = vmatprep.subr.mxu0 %v1041
    %1065 = vmatpush1.msra.mxu0 %v1040
    %1066 = vmatprep.subr.mxu0 %v1046
    %1067 = vmatpush1.msra.mxu0 %v1045
    %1068 = vmatprep.subr.mxu0 0.0
    %1069 = vmatpush1.msra.mxu0 0.0
    %1070 = vmatprep.subr.mxu0 0.0
    %1071 = vmatpush1.msra.mxu0 0.0
    %1072 = vmatprep.subr.mxu0 0.0
    %1073 = vmatpush1.msra.mxu0 0.0
    %1074 = vmatprep.subr.mxu0 0.0
    %1075 = vmatpush1.msra.mxu0 0.0
    %1076 = vmatprep.subr.mxu0 0.0
    %1077 = vmatpush1.msra.mxu0 0.0
    %1078 = vmatprep.subr.mxu0 0.0
    %1079 = vmatpush1.msra.mxu0 0.0
    %1080 = vmatprep.subr.mxu0 0.0
    %1081 = vmatpush1.msra.mxu0 0.0
    %1082 = vmatprep.subr.mxu0 0.0
    %1083 = vmatpush1.msra.mxu0 0.0
    %1084 = vmatprep.subr.mxu0 0.0
    %1085 = vmatpush1.msra.mxu0 0.0
    %1086 = vmatprep.subr.mxu0 0.0
    %1087 = vmatpush1.msra.mxu0 0.0
    %1088 = vmatprep.subr.mxu0 0.0
    %1089 = vmatpush1.msra.mxu0 0.0
    %1090 = vmatprep.subr.mxu0 0.0
    %1091 = vmatpush1.msra.mxu0 0.0
    %1092 = vmatprep.subr.mxu0 0.0
    %1093 = vmatpush1.msra.mxu0 0.0
    %1094 = vmatprep.subr.mxu0 0.0
    %1095 = vmatpush1.msra.mxu0 0.0
    %1096 = vmatprep.subr.mxu0 0.0
    %1097 = vmatpush1.msra.mxu0 0.0
    %1098 = vmatprep.subr.mxu0 0.0
    %1099 = vmatpush1.msra.mxu0 0.0
    %1100 = vmatprep.subr.mxu0 0.0
    %1101 = vmatpush1.msra.mxu0 0.0
    %1102 = vmatprep.subr.mxu0 0.0
    %1103 = vmatpush1.msra.mxu0 0.0
    %1104 = vmatprep.subr.mxu0 0.0
    %1105 = vmatpush1.msra.mxu0 0.0
    %1106 = vmatprep.subr.mxu0 0.0
    %1107 = vmatpush1.msra.mxu0 0.0
    %1108 = vmatprep.subr.mxu0 0.0
    %1109 = vmatpush1.msra.mxu0 0.0
    %1110 = vmatprep.subr.mxu0 0.0
    %1111 = vmatpush1.msra.mxu0 0.0
    %1112 = vmatprep.subr.mxu0 0.0
    %1113 = vmatpush1.msra.mxu0 0.0
    %1114 = vmatprep.mubr.f32.mxu0 0.0
    %1115 = vmatmul.mubr.f32.gmra.mrb[0].mxu0 %v676
    %v1116 = vpop.f32.mrb[0].mxu0
    %v1117 = vadd.f32 0.0, %v1116
    %v1118 = vpop.f32.mrb[0].mxu0
    %v1119 = vadd.f32 0.0, %v1118
    %1120 = vdwg.mxu0
    %1121 = vmatprep.subr.mxu0 %v1008
    %1122 = vmatpush1.msra.mxu0 %v1007
    %1123 = vmatprep.subr.mxu0 %v1013
    %1124 = vmatpush1.msra.mxu0 %v1012
    %1125 = vmatprep.subr.mxu0 %v1018
    %1126 = vmatpush1.msra.mxu0 %v1017
    %1127 = vmatprep.subr.mxu0 %v1023
    %1128 = vmatpush1.msra.mxu0 %v1022
    %1129 = vmatprep.subr.mxu0 %v1028
    %1130 = vmatpush1.msra.mxu0 %v1027
    %1131 = vmatprep.subr.mxu0 %v1033
    %1132 = vmatpush1.msra.mxu0 %v1032
    %1133 = vmatprep.subr.mxu0 %v1038
    %1134 = vmatpush1.msra.mxu0 %v1037
    %1135 = vmatprep.subr.mxu0 %v1043
    %1136 = vmatpush1.msra.mxu0 %v1042
    %1137 = vmatprep.subr.mxu0 %v1048
    %1138 = vmatpush1.msra.mxu0 %v1047
    %1139 = vmatprep.subr.mxu0 0.0
    %1140 = vmatpush1.msra.mxu0 0.0
    %1141 = vmatprep.subr.mxu0 0.0
    %1142 = vmatpush1.msra.mxu0 0.0
    %1143 = vmatprep.subr.mxu0 0.0
    %1144 = vmatpush1.msra.mxu0 0.0
    %1145 = vmatprep.subr.mxu0 0.0
    %1146 = vmatpush1.msra.mxu0 0.0
    %1147 = vmatprep.subr.mxu0 0.0
    %1148 = vmatpush1.msra.mxu0 0.0
    %1149 = vmatprep.subr.mxu0 0.0
    %1150 = vmatpush1.msra.mxu0 0.0
    %1151 = vmatprep.subr.mxu0 0.0
    %1152 = vmatpush1.msra.mxu0 0.0
    %1153 = vmatprep.subr.mxu0 0.0
    %1154 = vmatpush1.msra.mxu0 0.0
    %1155 = vmatprep.subr.mxu0 0.0
    %1156 = vmatpush1.msra.mxu0 0.0
    %1157 = vmatprep.subr.mxu0 0.0
    %1158 = vmatpush1.msra.mxu0 0.0
    %1159 = vmatprep.subr.mxu0 0.0
    %1160 = vmatpush1.msra.mxu0 0.0
    %1161 = vmatprep.subr.mxu0 0.0
    %1162 = vmatpush1.msra.mxu0 0.0
    %1163 = vmatprep.subr.mxu0 0.0
    %1164 = vmatpush1.msra.mxu0 0.0
    %1165 = vmatprep.subr.mxu0 0.0
    %1166 = vmatpush1.msra.mxu0 0.0
    %1167 = vmatprep.subr.mxu0 0.0
    %1168 = vmatpush1.msra.mxu0 0.0
    %1169 = vmatprep.subr.mxu0 0.0
    %1170 = vmatpush1.msra.mxu0 0.0
    %1171 = vmatprep.subr.mxu0 0.0
    %1172 = vmatpush1.msra.mxu0 0.0
    %1173 = vmatprep.subr.mxu0 0.0
    %1174 = vmatpush1.msra.mxu0 0.0
    %1175 = vmatprep.subr.mxu0 0.0
    %1176 = vmatpush1.msra.mxu0 0.0
    %1177 = vmatprep.subr.mxu0 0.0
    %1178 = vmatpush1.msra.mxu0 0.0
    %1179 = vmatprep.subr.mxu0 0.0
    %1180 = vmatpush1.msra.mxu0 0.0
    %1181 = vmatprep.subr.mxu0 0.0
    %1182 = vmatpush1.msra.mxu0 0.0
    %1183 = vmatprep.subr.mxu0 0.0
    %1184 = vmatpush1.msra.mxu0 0.0
    %1185 = vmatprep.mubr.f32.mxu0 0.0
    %1186 = vmatmul.mubr.f32.gmra.mrb[0].mxu0 %v676
    %v1187 = vpop.f32.mrb[0].mxu0
    %v1188 = vadd.f32 0.0, %v1187
    %v1189 = vpop.f32.mrb[0].mxu0
    %v1190 = vadd.f32 0.0, %v1189
    %1191 = vdwg.mxu0
    %1192 = vmatprep.subr.mxu0 0.0
    %1193 = vmatpush1.msra.mxu0 %v1009
    %1194 = vmatprep.subr.mxu0 0.0
    %1195 = vmatpush1.msra.mxu0 %v1014
    %1196 = vmatprep.subr.mxu0 0.0
    %1197 = vmatpush1.msra.mxu0 %v1019
    %1198 = vmatprep.subr.mxu0 0.0
    %1199 = vmatpush1.msra.mxu0 %v1024
    %1200 = vmatprep.subr.mxu0 0.0
    %1201 = vmatpush1.msra.mxu0 %v1029
    %1202 = vmatprep.subr.mxu0 0.0
    %1203 = vmatpush1.msra.mxu0 %v1034
    %1204 = vmatprep.subr.mxu0 0.0
    %1205 = vmatpush1.msra.mxu0 %v1039
    %1206 = vmatprep.subr.mxu0 0.0
    %1207 = vmatpush1.msra.mxu0 %v1044
    %1208 = vmatprep.subr.mxu0 0.0
    %1209 = vmatpush1.msra.mxu0 %v1049
    %1210 = vmatprep.subr.mxu0 0.0
    %1211 = vmatpush1.msra.mxu0 0.0
    %1212 = vmatprep.subr.mxu0 0.0
    %1213 = vmatpush1.msra.mxu0 0.0
    %1214 = vmatprep.subr.mxu0 0.0
    %1215 = vmatpush1.msra.mxu0 0.0
    %1216 = vmatprep.subr.mxu0 0.0
    %1217 = vmatpush1.msra.mxu0 0.0
    %1218 = vmatprep.subr.mxu0 0.0
    %1219 = vmatpush1.msra.mxu0 0.0
    %1220 = vmatprep.subr.mxu0 0.0
    %1221 = vmatpush1.msra.mxu0 0.0
    %1222 = vmatprep.subr.mxu0 0.0
    %1223 = vmatpush1.msra.mxu0 0.0
    %1224 = vmatprep.subr.mxu0 0.0
    %1225 = vmatpush1.msra.mxu0 0.0
    %1226 = vmatprep.subr.mxu0 0.0
    %1227 = vmatpush1.msra.mxu0 0.0
    %1228 = vmatprep.subr.mxu0 0.0
    %1229 = vmatpush1.msra.mxu0 0.0
    %1230 = vmatprep.subr.mxu0 0.0
    %1231 = vmatpush1.msra.mxu0 0.0
    %1232 = vmatprep.subr.mxu0 0.0
    %1233 = vmatpush1.msra.mxu0 0.0
    %1234 = vmatprep.subr.mxu0 0.0
    %1235 = vmatpush1.msra.mxu0 0.0
    %1236 = vmatprep.subr.mxu0 0.0
    %1237 = vmatpush1.msra.mxu0 0.0
    %1238 = vmatprep.subr.mxu0 0.0
    %1239 = vmatpush1.msra.mxu0 0.0
    %1240 = vmatprep.subr.mxu0 0.0
    %1241 = vmatpush1.msra.mxu0 0.0
    %1242 = vmatprep.subr.mxu0 0.0
    %1243 = vmatpush1.msra.mxu0 0.0
    %1244 = vmatprep.subr.mxu0 0.0
    %1245 = vmatpush1.msra.mxu0 0.0
    %1246 = vmatprep.subr.mxu0 0.0
    %1247 = vmatpush1.msra.mxu0 0.0
    %1248 = vmatprep.subr.mxu0 0.0
    %1249 = vmatpush1.msra.mxu0 0.0
    %1250 = vmatprep.subr.mxu0 0.0
    %1251 = vmatpush1.msra.mxu0 0.0
    %1252 = vmatprep.subr.mxu0 0.0
    %1253 = vmatpush1.msra.mxu0 0.0
    %1254 = vmatprep.subr.mxu0 0.0
    %1255 = vmatpush1.msra.mxu0 0.0
    %1256 = vmatprep.mubr.f32.mxu0 0.0
    %1257 = vmatmul.mubr.f32.gmra.mrb[0].mxu0 %v676
    %v1258 = vpop.f32.mrb[0].mxu0
    %v1259 = vadd.f32 0.0, %v1258
    %v1260 = vpop.f32.mrb[0].mxu0
    %1261 = vdwg.mxu0
    %v1262 = vld [vmem:[%s3 + $0x68] sm:$0xff]
    %v1263 = vld [vmem:[%s3 + $0x70] sm:$0xff]
    %v1264 = vld [vmem:[%s3 + $0x78] sm:$0xff]
    %v1265 = vld [vmem:[%s3 + $0x80] sm:$0xff]
    %v1266 = vld [vmem:[%s3 + $0x88] sm:$0xff]
    %v1267 = vld [vmem:[%s3 + $0x90] sm:$0xff]
    %v1268 = vld [vmem:[%s3 + $0x98] sm:$0xff]
    %v1269 = vld [vmem:[%s3 + $0xa0] sm:$0xff]
    %v1270 = vld [vmem:[%s3 + $0xa8] sm:$0xff]
    %v1271 = vld [vmem:[%s3 + $0xb0] sm:$0xff]
    %v1272 = vld [vmem:[%s3 + $0xb8] sm:$0xff]
    %v1273 = vld [vmem:[%s3 + $0xc0] sm:$0xff]
    %v1274 = vld [vmem:[%s3 + $0xc8] sm:$0xff]
    %v1275 = vld [vmem:[%s3 + $0xd0] sm:$0xff]
    %v1276 = vld [vmem:[%s3 + $0xd8] sm:$0xff]
    %v1277 = vld [vmem:[%s3 + $0xe0] sm:$0xff]
    %v1278 = vld [vmem:[%s3 + $0xe8] sm:$0xff]
    %v1279 = vld [vmem:[%s3 + $0xf0] sm:$0xff]
    %v1280 = vld [vmem:[%s3 + $0xf8] sm:$0xff]
    %v1281 = vld [vmem:[%s3 + $0x100] sm:$0xff]
    %v1282 = vld [vmem:[%s3 + $0x108] sm:$0xff]
    %v1283 = vld [vmem:[%s3 + $0x110] sm:$0xff]
    %v1284 = vld [vmem:[%s3 + $0x118] sm:$0xff]
    %v1285 = vld [vmem:[%s3 + $0x120] sm:$0xff]
    %v1286 = vld [vmem:[%s3 + $0x128] sm:$0xff]
    %v1287 = vld [vmem:[%s3 + $0x130] sm:$0xff]
    %v1288 = vld [vmem:[%s3 + $0x138] sm:$0xff]
    %v1289 = vld [vmem:[%s3 + $0x140] sm:$0xff]
    %v1290 = vld [vmem:[%s3 + $0x148] sm:$0xff]
    %v1291 = vld [vmem:[%s3 + $0x150] sm:$0xff]
    %v1292 = vld [vmem:[%s3 + $0x158] sm:$0xff]
    %v1293 = vld [vmem:[%s3 + $0x160] sm:$0xff]
    %v1294 = vld [vmem:[%s3 + $0x168] sm:$0xff]
    %v1295 = vld [vmem:[%s3 + $0x170] sm:$0xff]
    %v1296 = vld [vmem:[%s3 + $0x178] sm:$0xff]
    %v1297 = vld [vmem:[%s3 + $0x180] sm:$0xff]
    %v1298 = vld [vmem:[%s3 + $0x188] sm:$0xff]
    %v1299 = vld [vmem:[%s3 + $0x190] sm:$0xff]
    %v1300 = vld [vmem:[%s3 + $0x198] sm:$0xff]
    %v1301 = vld [vmem:[%s3 + $0x1a0] sm:$0xff]
    %v1302 = vld [vmem:[%s3 + $0x1a8] sm:$0xff]
    %v1303 = vld [vmem:[%s3 + $0x1b0] sm:$0xff]
    %v1304 = vld [vmem:[%s3 + $0x1b8] sm:$0xff]
    %v1305 = vld [vmem:[%s3 + $0x1c0] sm:$0xff]
    %v1306 = vld [vmem:[%s3 + $0x1c8] sm:$0xff]
    %v1307 = vld [vmem:[%s3 + $0x1d0] sm:$0xff]
    %v1308 = vld [vmem:[%s3 + $0x1d8] sm:$0xff]
    %v1309 = vld [vmem:[%s3 + $0x1e0] sm:$0xff]
    %v1310 = vld [vmem:[%s3 + $0x1e8] sm:$0xff]
    %v1311 = vld [vmem:[%s3 + $0x1f0] sm:$0xff]
    %v1312 = vld [vmem:[%s3 + $0x1f8] sm:$0xff]
    %v1313 = vld [vmem:[%s3 + $0x200] sm:$0xff]
    %v1314 = vld [vmem:[%s3 + $0x208] sm:$0xff]
    %v1315 = vld [vmem:[%s3 + $0x210] sm:$0xff]
    %v1316 = vld [vmem:[%s3 + $0x218] sm:$0xff]
    %v1317 = vld [vmem:[%s3 + $0x220] sm:$0xff]
    %v1318 = vld [vmem:[%s3 + $0x228] sm:$0xff]
    %v1319 = vld [vmem:[%s3 + $0x230] sm:$0xff]
    %v1320 = vld [vmem:[%s3 + $0x238] sm:$0xff]
    %v1321 = vld [vmem:[%s3 + $0x240] sm:$0xff]
    %v1322 = vld [vmem:[%s3 + $0x248] sm:$0xff]
    %v1323 = vld [vmem:[%s3 + $0x250] sm:$0xff]
    %v1324 = vld [vmem:[%s3 + $0x258] sm:$0xff]
    %v1325 = vld [vmem:[%s3 + $0x260] sm:$0xff]
    %v1326 = vld [vmem:[%s3 + $0x268] sm:$0xff]
    %v1327 = vld [vmem:[%s3 + $0x270] sm:$0xff]
    %v1328 = vld [vmem:[%s3 + $0x278] sm:$0xff]
    %v1329 = vld [vmem:[%s3 + $0x280] sm:$0xff]
    %v1330 = vld [vmem:[%s3 + $0x288] sm:$0xff]
    %v1331 = vld [vmem:[%s3 + $0x290] sm:$0xff]
    %v1332 = vld [vmem:[%s3 + $0x298] sm:$0xff]
    %v1333 = vld [vmem:[%s3 + $0x2a0] sm:$0xff]
    %v1334 = vmul.f32 %v860, %v1117
    %v1335 = vmul.f32 %v862, %v1119
    %v1336 = vmul.f32 %v931, %v1188
    %v1337 = vmul.f32 %v933, %v1190
    %v1338 = vmul.f32 %v1002, %v1259
    %vm1339 = vcmask 523264
    %v1341 = vsel %vm1339, %v1338, 0
    %1343 = vmatprep.subr.mxu0 0.0
    %1344 = vmatpush1.msra.mxu0 %v1262
    %1345 = vmatprep.subr.mxu0 0.0
    %1346 = vmatpush1.msra.mxu0 %v1263
    %1347 = vmatprep.subr.mxu0 0.0
    %1348 = vmatpush1.msra.mxu0 %v1264
    %1349 = vmatprep.subr.mxu0 0.0
    %1350 = vmatpush1.msra.mxu0 %v1265
    %1351 = vmatprep.subr.mxu0 0.0
    %1352 = vmatpush1.msra.mxu0 %v1266
    %1353 = vmatprep.subr.mxu0 0.0
    %1354 = vmatpush1.msra.mxu0 %v1267
    %1355 = vmatprep.subr.mxu0 0.0
    %1356 = vmatpush1.msra.mxu0 %v1268
    %1357 = vmatprep.subr.mxu0 0.0
    %1358 = vmatpush1.msra.mxu0 %v1269
    %1359 = vmatprep.subr.mxu0 0.0
    %1360 = vmatpush1.msra.mxu0 %v1270
    %1361 = vmatprep.subr.mxu0 0.0
    %1362 = vmatpush1.msra.mxu0 %v1271
    %1363 = vmatprep.subr.mxu0 0.0
    %1364 = vmatpush1.msra.mxu0 %v1272
    %1365 = vmatprep.subr.mxu0 0.0
    %1366 = vmatpush1.msra.mxu0 %v1273
    %1367 = vmatprep.subr.mxu0 0.0
    %1368 = vmatpush1.msra.mxu0 %v1274
    %1369 = vmatprep.subr.mxu0 0.0
    %1370 = vmatpush1.msra.mxu0 %v1275
    %1371 = vmatprep.subr.mxu0 0.0
    %1372 = vmatpush1.msra.mxu0 %v1276
    %1373 = vmatprep.subr.mxu0 0.0
    %1374 = vmatpush1.msra.mxu0 %v1277
    %1375 = vmatprep.subr.mxu0 0.0
    %1376 = vmatpush1.msra.mxu0 %v1278
    %1377 = vmatprep.subr.mxu0 0.0
    %1378 = vmatpush1.msra.mxu0 %v1279
    %1379 = vmatprep.subr.mxu0 0.0
    %1380 = vmatpush1.msra.mxu0 %v1280
    %1381 = vmatprep.subr.mxu0 0.0
    %1382 = vmatpush1.msra.mxu0 %v1281
    %1383 = vmatprep.subr.mxu0 0.0
    %1384 = vmatpush1.msra.mxu0 %v1282
    %1385 = vmatprep.subr.mxu0 0.0
    %1386 = vmatpush1.msra.mxu0 %v1283
    %1387 = vmatprep.subr.mxu0 0.0
    %1388 = vmatpush1.msra.mxu0 %v1284
    %1389 = vmatprep.subr.mxu0 0.0
    %1390 = vmatpush1.msra.mxu0 %v1285
    %1391 = vmatprep.subr.mxu0 0.0
    %1392 = vmatpush1.msra.mxu0 %v1286
    %1393 = vmatprep.subr.mxu0 0.0
    %1394 = vmatpush1.msra.mxu0 %v1287
    %1395 = vmatprep.subr.mxu0 0.0
    %1396 = vmatpush1.msra.mxu0 %v1288
    %1397 = vmatprep.subr.mxu0 0.0
    %1398 = vmatpush1.msra.mxu0 %v1289
    %1399 = vmatprep.subr.mxu0 0.0
    %1400 = vmatpush1.msra.mxu0 %v1290
    %1401 = vmatprep.subr.mxu0 0.0
    %1402 = vmatpush1.msra.mxu0 %v1291
    %1403 = vmatprep.subr.mxu0 0.0
    %1404 = vmatpush1.msra.mxu0 %v1292
    %1405 = vmatprep.subr.mxu0 0.0
    %1406 = vmatpush1.msra.mxu0 %v1293
    %1407 = vmatprep.mubr.f32.mxu0 %v1335
    %1408 = vmatmul.mubr.f32.gmra.mrb[0].mxu0 %v1334
    %v1409 = vpop.f32.mrb[0].mxu0
    %v1410 = vadd.f32 0.0, %v1409
    %v1411 = vpop.f32.mrb[0].mxu0
    %1412 = vdwg.mxu0
    %1413 = vmatprep.subr.mxu0 0.0
    %1414 = vmatpush1.msra.mxu0 %v1294
    %1415 = vmatprep.subr.mxu0 0.0
    %1416 = vmatpush1.msra.mxu0 %v1295
    %1417 = vmatprep.subr.mxu0 0.0
    %1418 = vmatpush1.msra.mxu0 %v1296
    %1419 = vmatprep.subr.mxu0 0.0
    %1420 = vmatpush1.msra.mxu0 %v1297
    %1421 = vmatprep.subr.mxu0 0.0
    %1422 = vmatpush1.msra.mxu0 %v1298
    %1423 = vmatprep.subr.mxu0 0.0
    %1424 = vmatpush1.msra.mxu0 %v1299
    %1425 = vmatprep.subr.mxu0 0.0
    %1426 = vmatpush1.msra.mxu0 %v1300
    %1427 = vmatprep.subr.mxu0 0.0
    %1428 = vmatpush1.msra.mxu0 %v1301
    %1429 = vmatprep.subr.mxu0 0.0
    %1430 = vmatpush1.msra.mxu0 %v1302
    %1431 = vmatprep.subr.mxu0 0.0
    %1432 = vmatpush1.msra.mxu0 %v1303
    %1433 = vmatprep.subr.mxu0 0.0
    %1434 = vmatpush1.msra.mxu0 %v1304
    %1435 = vmatprep.subr.mxu0 0.0
    %1436 = vmatpush1.msra.mxu0 %v1305
    %1437 = vmatprep.subr.mxu0 0.0
    %1438 = vmatpush1.msra.mxu0 %v1306
    %1439 = vmatprep.subr.mxu0 0.0
    %1440 = vmatpush1.msra.mxu0 %v1307
    %1441 = vmatprep.subr.mxu0 0.0
    %1442 = vmatpush1.msra.mxu0 %v1308
    %1443 = vmatprep.subr.mxu0 0.0
    %1444 = vmatpush1.msra.mxu0 %v1309
    %1445 = vmatprep.subr.mxu0 0.0
    %1446 = vmatpush1.msra.mxu0 %v1310
    %1447 = vmatprep.subr.mxu0 0.0
    %1448 = vmatpush1.msra.mxu0 %v1311
    %1449 = vmatprep.subr.mxu0 0.0
    %1450 = vmatpush1.msra.mxu0 %v1312
    %1451 = vmatprep.subr.mxu0 0.0
    %1452 = vmatpush1.msra.mxu0 %v1313
    %1453 = vmatprep.subr.mxu0 0.0
    %1454 = vmatpush1.msra.mxu0 %v1314
    %1455 = vmatprep.subr.mxu0 0.0
    %1456 = vmatpush1.msra.mxu0 %v1315
    %1457 = vmatprep.subr.mxu0 0.0
    %1458 = vmatpush1.msra.mxu0 %v1316
    %1459 = vmatprep.subr.mxu0 0.0
    %1460 = vmatpush1.msra.mxu0 %v1317
    %1461 = vmatprep.subr.mxu0 0.0
    %1462 = vmatpush1.msra.mxu0 %v1318
    %1463 = vmatprep.subr.mxu0 0.0
    %1464 = vmatpush1.msra.mxu0 %v1319
    %1465 = vmatprep.subr.mxu0 0.0
    %1466 = vmatpush1.msra.mxu0 %v1320
    %1467 = vmatprep.subr.mxu0 0.0
    %1468 = vmatpush1.msra.mxu0 %v1321
    %1469 = vmatprep.subr.mxu0 0.0
    %1470 = vmatpush1.msra.mxu0 %v1322
    %1471 = vmatprep.subr.mxu0 0.0
    %1472 = vmatpush1.msra.mxu0 %v1323
    %1473 = vmatprep.subr.mxu0 0.0
    %1474 = vmatpush1.msra.mxu0 %v1324
    %1475 = vmatprep.subr.mxu0 0.0
    %1476 = vmatpush1.msra.mxu0 %v1325
    %1477 = vmatprep.mubr.f32.mxu0 %v1337
    %1478 = vmatmul.mubr.f32.gmra.mrb[0].mxu0 %v1336
    %v1479 = vpop.f32.mrb[0].mxu0
    %v1480 = vadd.f32 %v1410, %v1479
    %v1481 = vpop.f32.mrb[0].mxu0
    %1482 = vdwg.mxu0
    %1483 = vmatprep.subr.mxu0 0.0
    %1484 = vmatpush1.msra.mxu0 %v1326
    %1485 = vmatprep.subr.mxu0 0.0
    %1486 = vmatpush1.msra.mxu0 %v1327
    %1487 = vmatprep.subr.mxu0 0.0
    %1488 = vmatpush1.msra.mxu0 %v1328
    %1489 = vmatprep.subr.mxu0 0.0
    %1490 = vmatpush1.msra.mxu0 %v1329
    %1491 = vmatprep.subr.mxu0 0.0
    %1492 = vmatpush1.msra.mxu0 %v1330
    %1493 = vmatprep.subr.mxu0 0.0
    %1494 = vmatpush1.msra.mxu0 %v1331
    %1495 = vmatprep.subr.mxu0 0.0
    %1496 = vmatpush1.msra.mxu0 %v1332
    %1497 = vmatprep.subr.mxu0 0.0
    %1498 = vmatpush1.msra.mxu0 %v1333
    %1499 = vmatprep.subr.mxu0 0.0
    %1500 = vmatpush1.msra.mxu0 0.0
    %1501 = vmatprep.subr.mxu0 0.0
    %1502 = vmatpush1.msra.mxu0 0.0
    %1503 = vmatprep.subr.mxu0 0.0
    %1504 = vmatpush1.msra.mxu0 0.0
    %1505 = vmatprep.subr.mxu0 0.0
    %1506 = vmatpush1.msra.mxu0 0.0
    %1507 = vmatprep.subr.mxu0 0.0
    %1508 = vmatpush1.msra.mxu0 0.0
    %1509 = vmatprep.subr.mxu0 0.0
    %1510 = vmatpush1.msra.mxu0 0.0
    %1511 = vmatprep.subr.mxu0 0.0
    %1512 = vmatpush1.msra.mxu0 0.0
    %1513 = vmatprep.subr.mxu0 0.0
    %1514 = vmatpush1.msra.mxu0 0.0
    %1515 = vmatprep.subr.mxu0 0.0
    %1516 = vmatpush1.msra.mxu0 0.0
    %1517 = vmatprep.subr.mxu0 0.0
    %1518 = vmatpush1.msra.mxu0 0.0
    %1519 = vmatprep.subr.mxu0 0.0
    %1520 = vmatpush1.msra.mxu0 0.0
    %1521 = vmatprep.subr.mxu0 0.0
    %1522 = vmatpush1.msra.mxu0 0.0
    %1523 = vmatprep.subr.mxu0 0.0
    %1524 = vmatpush1.msra.mxu0 0.0
    %1525 = vmatprep.subr.mxu0 0.0
    %1526 = vmatpush1.msra.mxu0 0.0
    %1527 = vmatprep.subr.mxu0 0.0
    %1528 = vmatpush1.msra.mxu0 0.0
    %1529 = vmatprep.subr.mxu0 0.0
    %1530 = vmatpush1.msra.mxu0 0.0
    %1531 = vmatprep.subr.mxu0 0.0
    %1532 = vmatpush1.msra.mxu0 0.0
    %1533 = vmatprep.subr.mxu0 0.0
    %1534 = vmatpush1.msra.mxu0 0.0
    %1535 = vmatprep.subr.mxu0 0.0
    %1536 = vmatpush1.msra.mxu0 0.0
    %1537 = vmatprep.subr.mxu0 0.0
    %1538 = vmatpush1.msra.mxu0 0.0
    %1539 = vmatprep.subr.mxu0 0.0
    %1540 = vmatpush1.msra.mxu0 0.0
    %1541 = vmatprep.subr.mxu0 0.0
    %1542 = vmatpush1.msra.mxu0 0.0
    %1543 = vmatprep.subr.mxu0 0.0
    %1544 = vmatpush1.msra.mxu0 0.0
    %1545 = vmatprep.subr.mxu0 0.0
    %1546 = vmatpush1.msra.mxu0 0.0
    %1547 = vmatprep.mubr.f32.mxu0 0.0
    %1548 = vmatmul.mubr.f32.gmra.mrb[0].mxu0 %v1341
    %v1549 = vpop.f32.mrb[0].mxu0
    %v1550 = vadd.f32 %v1480, %v1549
    %v1551 = vpop.f32.mrb[0].mxu0
    %1552 = vdwg.mxu0
    %v1553 = vadd.f32 %v745, %v1550
    %v1554 = vld [vmem:[%s3 + $0x2b0] sm:$0x1]
    %v1555 = vld [vmem:[%s3 + $0x2b8] sm:$0x1]
    %v1556 = vsel %vm387, %v1553, 0.0
    %v1557 = vrot.slane %v1556, 4
    %v1558 = vadd.f32 %v1556, %v1557
    %v1559 = vrot.slane %v1558, 2
    %v1560 = vadd.f32 %v1558, %v1559
    %v1561 = vrot.slane %v1560, 1
    %v1562 = vadd.f32 %v1560, %v1561
    %v1563 = vrcp.pop 4.0
    %v1564 = vmul.f32 %v1562, %v1563
    %v1565 = vsub.f32 %v1553, %v1564
    %v1566 = vmul.f32 %v1565, %v1565
    %v1567 = vsel %vm387, %v1566, 0.0
    %v1568 = vrot.slane %v1567, 4
    %v1569 = vadd.f32 %v1567, %v1568
    %v1570 = vrot.slane %v1569, 2
    %v1571 = vadd.f32 %v1569, %v1570
    %v1572 = vrot.slane %v1571, 1
    %v1573 = vadd.f32 %v1571, %v1572
    %v1574 = vmul.f32 %v1573, %v1563
    %v1575 = vadd.f32 %v1574, 1e-05
    %v1576 = vrsqrt.pop %v1575
    %v1577 = vmul.f32 %v1565, %v1576
    %v1578 = vlaneseq
    %v1579 = vshrl.u32 %v1578, 7
    %v1580 = vsub.s32 0, %v1579
    %v1581 = vrot.slane %v1554, %v1580
    %v1582 = vmul.f32 %v1577, %v1581
    %v1583 = vlaneseq
    %v1584 = vshrl.u32 %v1583, 7
    %v1585 = vsub.s32 0, %v1584
    %v1586 = vrot.slane %v1555, %v1585
    %v1587 = vadd.f32 %v1582, %v1586
    %v1588 = vmax.f32 %v1587, 0.0
    %1589 = vst.msk [vmem:[#allocation3] sm:$0xf] %vm387, %v1588
    %vm1590 = vcmask 322816
    %1591 = vst.msk [vmem:[#allocation3] sm:$0xf] %vm1590, %v650
    %v1592 = vld [vmem:[%s3 + $0x2c8] sm:$0xff]
    %v1593 = vld [vmem:[%s3 + $0x2d0] sm:$0xff]
    %v1594 = vld [vmem:[%s3 + $0x2d8] sm:$0xff]
    %v1595 = vld [vmem:[%s3 + $0x2e0] sm:$0xff]
    %v1596 = vld [vmem:[%s3 + $0x2e8] sm:$0xff]
    %v1597 = vld [vmem:[%s3 + $0x2c0] sm:$0x1]
    %v1598 = vld [vmem:[#allocation3] sm:$0xf]
    %v1599 = vlaneseq
    %v1600 = vshrl.u32 %v1599, 7
    %v1601 = vsub.s32 0, %v1600
    %v1602 = vrot.slane %v1597, %v1601
    %vm1603 = vcmask 326656
    %v1605 = vsel %vm1603, %v1598, 0
    %1607 = vmatprep.subr.mxu0 0.0
    %1608 = vmatpush1.msra.mxu0 %v1592
    %1609 = vmatprep.subr.mxu0 0.0
    %1610 = vmatpush1.msra.mxu0 %v1593
    %1611 = vmatprep.subr.mxu0 0.0
    %1612 = vmatpush1.msra.mxu0 %v1594
    %1613 = vmatprep.subr.mxu0 0.0
    %1614 = vmatpush1.msra.mxu0 %v1595
    %1615 = vmatprep.subr.mxu0 0.0
    %1616 = vmatpush1.msra.mxu0 %v1596
    %1617 = vmatprep.subr.mxu0 0.0
    %1618 = vmatpush1.msra.mxu0 0.0
    %1619 = vmatprep.subr.mxu0 0.0
    %1620 = vmatpush1.msra.mxu0 0.0
    %1621 = vmatprep.subr.mxu0 0.0
    %1622 = vmatpush1.msra.mxu0 0.0
    %1623 = vmatprep.subr.mxu0 0.0
    %1624 = vmatpush1.msra.mxu0 0.0
    %1625 = vmatprep.subr.mxu0 0.0
    %1626 = vmatpush1.msra.mxu0 0.0
    %1627 = vmatprep.subr.mxu0 0.0
    %1628 = vmatpush1.msra.mxu0 0.0
    %1629 = vmatprep.subr.mxu0 0.0
    %1630 = vmatpush1.msra.mxu0 0.0
    %1631 = vmatprep.subr.mxu0 0.0
    %1632 = vmatpush1.msra.mxu0 0.0
    %1633 = vmatprep.subr.mxu0 0.0
    %1634 = vmatpush1.msra.mxu0 0.0
    %1635 = vmatprep.subr.mxu0 0.0
    %1636 = vmatpush1.msra.mxu0 0.0
    %1637 = vmatprep.subr.mxu0 0.0
    %1638 = vmatpush1.msra.mxu0 0.0
    %1639 = vmatprep.subr.mxu0 0.0
    %1640 = vmatpush1.msra.mxu0 0.0
    %1641 = vmatprep.subr.mxu0 0.0
    %1642 = vmatpush1.msra.mxu0 0.0
    %1643 = vmatprep.subr.mxu0 0.0
    %1644 = vmatpush1.msra.mxu0 0.0
    %1645 = vmatprep.subr.mxu0 0.0
    %1646 = vmatpush1.msra.mxu0 0.0
    %1647 = vmatprep.subr.mxu0 0.0
    %1648 = vmatpush1.msra.mxu0 0.0
    %1649 = vmatprep.subr.mxu0 0.0
    %1650 = vmatpush1.msra.mxu0 0.0
    %1651 = vmatprep.subr.mxu0 0.0
    %1652 = vmatpush1.msra.mxu0 0.0
    %1653 = vmatprep.subr.mxu0 0.0
    %1654 = vmatpush1.msra.mxu0 0.0
    %1655 = vmatprep.subr.mxu0 0.0
    %1656 = vmatpush1.msra.mxu0 0.0
    %1657 = vmatprep.subr.mxu0 0.0
    %1658 = vmatpush1.msra.mxu0 0.0
    %1659 = vmatprep.subr.mxu0 0.0
    %1660 = vmatpush1.msra.mxu0 0.0
    %1661 = vmatprep.subr.mxu0 0.0
    %1662 = vmatpush1.msra.mxu0 0.0
    %1663 = vmatprep.subr.mxu0 0.0
    %1664 = vmatpush1.msra.mxu0 0.0
    %1665 = vmatprep.subr.mxu0 0.0
    %1666 = vmatpush1.msra.mxu0 0.0
    %1667 = vmatprep.subr.mxu0 0.0
    %1668 = vmatpush1.msra.mxu0 0.0
    %1669 = vmatprep.subr.mxu0 0.0
    %1670 = vmatpush1.msra.mxu0 0.0
    %1671 = vmatprep.mubr.f32.mxu0 0.0
    %1672 = vmatmul.mubr.f32.gmra.mrb[0].mxu0 %v1605
    %v1673 = vpop.f32.mrb[0].mxu0
    %v1674 = vadd.f32 %v1602, %v1673
    %v1675 = vpop.f32.mrb[0].mxu0
    %1676 = vdwg.mxu0
    %vm1677 = vcmask 125952
    %1678 = vst.msk [vmem:[#allocation4] sm:$0xf] %vm1677, %v1674
    // Predicated region
    $region18: #{rim_forward.1} parent=1 // pred_check
      _
    $region19: #{rim_forward.1} parent=1 // pred_check_branch
      %1680 = sbr.rel (0) target = $region21
    $region20: #{rim_forward.1} parent=1 // pred_region
      %s1682 = ssub.s32 64, 64
      %1683 = vsyncadd [#allocation5], %s1682
      %s1685 = sshll.u32 [#allocation4], 4
      %s1686 = int_to_ptr.vmem [resolvable:$true] %s1685
      %1688 = dma.vmem_to_hbm [thread:$0]  %s1686, 64, %s4, [#allocation5]
    $region21: #{rim_forward.1} parent=1 // pred_fallthru
      _
    // Predicated region
    $region22: #{rim_forward.1} parent=1 // pred_check
      _
    $region23: #{rim_forward.1} parent=1 // pred_check_branch
      %1690 = sbr.rel (0) target = $region25
    $region24: #{rim_forward.1} parent=1 // pred_region
      %1691 = dma.done [#allocation5], 64
    $region25: #{rim_forward.1} parent=1 // pred_fallthru
      _
    %1692 = vsyncpa [#allocation5], 1

</llo_original>
